<compile_context>
chip_gen: v7x
topology: tpu7x:2x2x1
jax: 0.10.0
libtpu: 0.0.40
codegen_flags: <defaults>
</compile_context>

<pallas_src>
import functools

import jax
import jax.numpy as jnp
from jax.experimental import pallas as pl
from jax.experimental.pallas import tpu as pltpu


# ----------------------------------------------------------------------------
# In-kernel helpers
# ----------------------------------------------------------------------------
def _masked_softmax(vec, mk, axis):
    """Exact semantics of the reference masked_softmax (memory_efficient=False)."""
    z = vec * mk
    z = z - jnp.max(z, axis=axis, keepdims=True)
    e = jnp.exp(z)
    r = e / jnp.sum(e, axis=axis, keepdims=True)
    r = r * mk
    # renormalization divide on the EUP (free slot after the exp)
    return r * pl.reciprocal(jnp.sum(r, axis=axis, keepdims=True) + 1e-13,
                             approx=True)


# ----------------------------------------------------------------------------
# Fused kernel: all GCN layers for one batch element, fully VMEM-resident
# ----------------------------------------------------------------------------
def _fused_gcn_kernel(seq_ref, mask_ref, adj_ref, w_ref, gwcat_ref, gb_ref,
                      out_ref, *, l1, layers, edge_types, fout, use_coattn):
    feat = seq_ref[0]            # (N, F)
    m = mask_ref[0]              # (L1, L2)
    adj_b = adj_ref[0]           # (E, N, N)
    n = feat.shape[0]

    for i in range(layers):      # static unrolled layer loop (small)
        # ---- stacked GCN contraction: X @ [W_0 | W_1 | ... | W_{E-1}]
        xw_all = jnp.dot(feat, gwcat_ref[i],
                         preferred_element_type=jnp.float32)        # (N, E*Fout)

        acc = jnp.zeros((n, fout), jnp.float32)
        for e in range(edge_types):                                  # static, small
            acc = acc + jnp.dot(adj_b[e],
                                xw_all[:, e * fout:(e + 1) * fout],
                                preferred_element_type=jnp.float32)  # (N, Fout)

        if use_coattn:
            # ---- co-attention: C = tanh(S1 W S2^T), masked softmax both ways
            s1 = feat[:l1]                                           # (L1, F)
            s2 = feat[l1:]                                           # (L2, F)
            s1w = jnp.dot(s1, w_ref[i], preferred_element_type=jnp.float32)
            c = jnp.tanh(
                jax.lax.dot_general(s1w, s2, (((1,), (1,)), ((), ())),
                                    preferred_element_type=jnp.float32))  # (L1,L2)
            c1 = _masked_softmax(c, m, axis=1)    # row-normalized  == C1
            c2t = _masked_softmax(c, m, axis=0)   # col-normalized  == C2^T

            # The zero-padded C-block occupies only the last edge slot, so its
            # contribution to sum_e A_e (X W_e) is:
            #   rows [0:L1]  : C1  @ (X2 W_last)
            #   rows [L1:N]  : C2  @ (X1 W_last)
            xw_last = xw_all[:, (edge_types - 1) * fout:]            # (N, Fout)
            top = jnp.dot(c1, xw_last[l1:],
                          preferred_element_type=jnp.float32)        # (L1, Fout)
            bot = jax.lax.dot_general(c2t, xw_last[:l1],
                                      (((0,), (0,)), ((), ())),
                                      preferred_element_type=jnp.float32)  # (L2,Fout)
            acc = acc + jnp.concatenate([top, bot], axis=0)

        # bias + relu (use_highway=False, dropout/bn are inference no-ops)
        feat = jnp.maximum(acc + gb_ref[i], 0.0)                     # (N, Fout)

    out_ref[0] = feat.astype(out_ref.dtype)


# ----------------------------------------------------------------------------
# Parameter init (deterministic, xavier-uniform with tanh gain, like __init__)
# ----------------------------------------------------------------------------
def xavier_uniform(key, shape, gain):
    fan_in, fan_out = shape[-2], shape[-1]
    bound = gain * jnp.sqrt(6.0 / (fan_in + fan_out))
    return jax.random.uniform(key, shape, jnp.float32, -bound, bound)


def init_params(key, hyps):
    gain = 5.0 / 3.0  # nn.init.calculate_gain('tanh')
    L = hyps["gcn_layers"]
    fin, fout, E = hyps["in_features"], hyps["out_features"], hyps["edge_types"]
    # co_attn path (and weight stacking) requires in_features == out_features,
    # just like the original module's matmul shapes do.
    assert fin == fout, "GCN co_attn path requires in_features == out_features"
    keys = jax.random.split(key, 2 * L + 2)
    params = {"W": [], "gcn_W": [], "gcn_b": []}
    # self.W: one (in, out) + gcn_layers x (out, out)
    params["W"].append(xavier_uniform(keys[0], (fin, fout), gain))
    for i in range(L):
        params["W"].append(xavier_uniform(keys[1 + i], (fout, fout), gain))
    # GraphConvolution weights: per layer (E, F, F) + bias
    for i in range(L):
        params["gcn_W"].append(
            xavier_uniform(keys[1 + L + i], (E, fout, fout), 1.0))
        params["gcn_b"].append(jnp.zeros((fout,), jnp.float32))
    return params


# ----------------------------------------------------------------------------
# Forward pass (mirrors GCN.forward) — single fused pallas_call
# ----------------------------------------------------------------------------
def gcn_forward(params, hyps, mutual_link, seq_features1, mask1,
                seq_features2, mask2, adj):
    B, L1, F = seq_features1.shape
    L2 = seq_features2.shape[1]
    N = L1 + L2
    E = adj.shape[1]
    L = hyps["gcn_layers"]
    Fout = hyps["out_features"]

    # Cheap one-time host-side prep (plain XLA ops).
    seq = jnp.concatenate([seq_features1, seq_features2], axis=1)   # (B, N, F)
    mask = mask1[:, :, None] * mask2[:, None, :]                    # (B, L1, L2)

    w_stack = jnp.stack(params["W"][:L])                            # (L, F, F)
    gw = jnp.stack(params["gcn_W"])                                 # (L, E, F, Fout)
    # (L, E, F, Fout) -> (L, F, E*Fout): one stacked XW matmul per layer
    gw_cat = jnp.transpose(gw, (0, 2, 1, 3)).reshape(L, F, E * Fout)
    gb = jnp.stack(params["gcn_b"]).reshape(L, 1, Fout)             # (L, 1, Fout)

    kernel = functools.partial(
        _fused_gcn_kernel, l1=L1, layers=L, edge_types=E, fout=Fout,
        use_coattn=(mutual_link == "co_attn"))

    out = pl.pallas_call(
        kernel,
        out_shape=jax.ShapeDtypeStruct((B, N, Fout), jnp.float32),
        grid=(B,),
        in_specs=[
            pl.BlockSpec((1, N, F), lambda b: (b, 0, 0)),
            pl.BlockSpec((1, L1, L2), lambda b: (b, 0, 0)),
            pl.BlockSpec((1, E, N, N), lambda b: (b, 0, 0, 0)),
            pl.BlockSpec((L, F, F), lambda b: (0, 0, 0)),           # resident weights
            pl.BlockSpec((L, F, E * Fout), lambda b: (0, 0, 0)),
            pl.BlockSpec((L, 1, Fout), lambda b: (0, 0, 0)),
        ],
        out_specs=pl.BlockSpec((1, N, Fout), lambda b: (b, 0, 0)),
        compiler_params=pltpu.CompilerParams(
            dimension_semantics=("parallel",)),
    )(seq, mask, adj, w_stack, gw_cat, gb)

    return out[:, :L1, :], out[:, L1:, :]


# ----------------------------------------------------------------------------
if __name__ == "__main__":
    hyps = {
        "gcn_layers": 2,
        "in_features": 32,
        "out_features": 32,
        "edge_types": 3,
        "gcn_dp": 0.0,
        "gcn_use_bn": False,
        "use_highway": False,
    }
    mutual_link = "co_attn"

    B, L1, L2, F, E = 2, 8, 8, 32, hyps["edge_types"]
    N = L1 + L2

    key = jax.random.PRNGKey(0)
    k_par, k1, k2, k3, k4, k5 = jax.random.split(key, 6)
    params = init_params(k_par, hyps)

    seq_features1 = jax.random.normal(k1, (B, L1, F), jnp.float32)
    seq_features2 = jax.random.normal(k2, (B, L2, F), jnp.float32)
    mask1 = (jax.random.uniform(k3, (B, L1)) > 0.2).astype(jnp.float32)
    mask2 = (jax.random.uniform(k4, (B, L2)) > 0.2).astype(jnp.float32)
    adj = jax.random.uniform(k5, (B, E, N, N), jnp.float32)

    out1, out2 = gcn_forward(params, hyps, mutual_link,
                             seq_features1, mask1, seq_features2, mask2, adj)
    jax.block_until_ready((out1, out2))
    assert out1.shape == (B, L1, hyps["out_features"])
    assert out2.shape == (B, L2, hyps["out_features"])
    assert bool(jnp.all(jnp.isfinite(out1))) and bool(jnp.all(jnp.isfinite(out2)))
    print("KERNEL_OK")
</pallas_src>

<mosaic_0001>
module attributes {stable_mosaic.version = 11 : i64} {
  func.func @_fused_gcn_kernel(%arg0: i32, %arg1: memref<1x16x32xf32, #tpu.memory_space<vmem>>, %arg2: memref<1x8x8xf32, #tpu.memory_space<vmem>>, %arg3: memref<1x3x16x16xf32, #tpu.memory_space<vmem>>, %arg4: memref<2x32x32xf32, #tpu.memory_space<vmem>>, %arg5: memref<2x32x96xf32, #tpu.memory_space<vmem>>, %arg6: memref<2x1x32xf32, #tpu.memory_space<vmem>>, %arg7: memref<1x16x32xf32, #tpu.memory_space<vmem>>) attributes {dimension_semantics = [#tpu.dimension_semantics<parallel>], iteration_bounds = array<i64: 2>, scalar_prefetch = 0 : i64, scratch_operands = 0 : i64, tpu.core_type = #tpu.core_type<tc>, window_params = [{transform_indices = @transform_0, window_bounds = array<i64: 1, 16, 32>}, {transform_indices = @transform_1, window_bounds = array<i64: 1, 8, 8>}, {transform_indices = @transform_2, window_bounds = array<i64: 1, 3, 16, 16>}, {pipeline_mode = #tpu.pipeline_mode<synchronous>, transform_indices = @transform_3, window_bounds = array<i64: 2, 32, 32>}, {pipeline_mode = #tpu.pipeline_mode<synchronous>, transform_indices = @transform_4, window_bounds = array<i64: 2, 32, 96>}, {pipeline_mode = #tpu.pipeline_mode<synchronous>, transform_indices = @transform_5, window_bounds = array<i64: 2, 1, 32>}, {transform_indices = @transform_6, window_bounds = array<i64: 1, 16, 32>}]} {
    %c0 = arith.constant 0 : index
    %c0_0 = arith.constant 0 : index
    %c0_1 = arith.constant 0 : index
    %0 = vector.load %arg1[%c0, %c0_0, %c0_1] : memref<1x16x32xf32, #tpu.memory_space<vmem>>, vector<1x16x32xf32>
    %1 = vector.shape_cast %0 : vector<1x16x32xf32> to vector<16x32xf32>
    %c0_2 = arith.constant 0 : index
    %c0_3 = arith.constant 0 : index
    %c0_4 = arith.constant 0 : index
    %2 = vector.load %arg2[%c0_2, %c0_3, %c0_4] : memref<1x8x8xf32, #tpu.memory_space<vmem>>, vector<1x8x8xf32>
    %3 = vector.shape_cast %2 : vector<1x8x8xf32> to vector<8x8xf32>
    %c0_5 = arith.constant 0 : index
    %c0_6 = arith.constant 0 : index
    %c0_7 = arith.constant 0 : index
    %c0_8 = arith.constant 0 : index
    %4 = vector.load %arg3[%c0_5, %c0_6, %c0_7, %c0_8] : memref<1x3x16x16xf32, #tpu.memory_space<vmem>>, vector<1x3x16x16xf32>
    %5 = vector.shape_cast %4 : vector<1x3x16x16xf32> to vector<3x16x16xf32>
    %c0_9 = arith.constant 0 : index
    %c0_10 = arith.constant 0 : index
    %c0_11 = arith.constant 0 : index
    %6 = vector.load %arg5[%c0_9, %c0_10, %c0_11] : memref<2x32x96xf32, #tpu.memory_space<vmem>>, vector<1x32x96xf32>
    %7 = vector.shape_cast %6 : vector<1x32x96xf32> to vector<32x96xf32>
    %cst = arith.constant dense<0.000000e+00> : vector<16x96xf32>
    %8 = tpu.matmul %1, %7, %cst {dimension_numbers = #tpu.dot_dimension_numbers<[1], [0], [0], [1], [0, 0, 1, 1], [], []>} : vector<16x32xf32>, vector<32x96xf32>, vector<16x96xf32> -> vector<16x96xf32>
    %cst_12 = arith.constant 0.000000e+00 : f32
    %9 = vector.broadcast %cst_12 : f32 to vector<16x32xf32>
    %10 = vector.extract_strided_slice %5 {offsets = [0, 0, 0], sizes = [1, 16, 16], strides = [1, 1, 1]} : vector<3x16x16xf32> to vector<1x16x16xf32>
    %11 = vector.shape_cast %10 : vector<1x16x16xf32> to vector<16x16xf32>
    %12 = vector.extract_strided_slice %8 {offsets = [0, 0], sizes = [16, 32], strides = [1, 1]} : vector<16x96xf32> to vector<16x32xf32>
    %cst_13 = arith.constant dense<0.000000e+00> : vector<16x32xf32>
    %13 = tpu.matmul %11, %12, %cst_13 {dimension_numbers = #tpu.dot_dimension_numbers<[1], [0], [0], [1], [0, 0, 1, 1], [], []>} : vector<16x16xf32>, vector<16x32xf32>, vector<16x32xf32> -> vector<16x32xf32>
    %14 = arith.addf %9, %13 : vector<16x32xf32>
    %15 = vector.extract_strided_slice %5 {offsets = [1, 0, 0], sizes = [1, 16, 16], strides = [1, 1, 1]} : vector<3x16x16xf32> to vector<1x16x16xf32>
    %16 = vector.shape_cast %15 : vector<1x16x16xf32> to vector<16x16xf32>
    %17 = vector.extract_strided_slice %8 {offsets = [0, 32], sizes = [16, 32], strides = [1, 1]} : vector<16x96xf32> to vector<16x32xf32>
    %cst_14 = arith.constant dense<0.000000e+00> : vector<16x32xf32>
    %18 = tpu.matmul %16, %17, %cst_14 {dimension_numbers = #tpu.dot_dimension_numbers<[1], [0], [0], [1], [0, 0, 1, 1], [], []>} : vector<16x16xf32>, vector<16x32xf32>, vector<16x32xf32> -> vector<16x32xf32>
    %19 = arith.addf %14, %18 : vector<16x32xf32>
    %20 = vector.extract_strided_slice %5 {offsets = [2, 0, 0], sizes = [1, 16, 16], strides = [1, 1, 1]} : vector<3x16x16xf32> to vector<1x16x16xf32>
    %21 = vector.shape_cast %20 : vector<1x16x16xf32> to vector<16x16xf32>
    %22 = vector.extract_strided_slice %8 {offsets = [0, 64], sizes = [16, 32], strides = [1, 1]} : vector<16x96xf32> to vector<16x32xf32>
    %cst_15 = arith.constant dense<0.000000e+00> : vector<16x32xf32>
    %23 = tpu.matmul %21, %22, %cst_15 {dimension_numbers = #tpu.dot_dimension_numbers<[1], [0], [0], [1], [0, 0, 1, 1], [], []>} : vector<16x16xf32>, vector<16x32xf32>, vector<16x32xf32> -> vector<16x32xf32>
    %24 = arith.addf %19, %23 : vector<16x32xf32>
    %25 = vector.extract_strided_slice %1 {offsets = [0, 0], sizes = [8, 32], strides = [1, 1]} : vector<16x32xf32> to vector<8x32xf32>
    %26 = vector.extract_strided_slice %1 {offsets = [8, 0], sizes = [8, 32], strides = [1, 1]} : vector<16x32xf32> to vector<8x32xf32>
    %c0_16 = arith.constant 0 : index
    %c0_17 = arith.constant 0 : index
    %c0_18 = arith.constant 0 : index
    %27 = vector.load %arg4[%c0_16, %c0_17, %c0_18] : memref<2x32x32xf32, #tpu.memory_space<vmem>>, vector<1x32x32xf32>
    %28 = vector.shape_cast %27 : vector<1x32x32xf32> to vector<32x32xf32>
    %cst_19 = arith.constant dense<0.000000e+00> : vector<8x32xf32>
    %29 = tpu.matmul %25, %28, %cst_19 {dimension_numbers = #tpu.dot_dimension_numbers<[1], [0], [0], [1], [0, 0, 1, 1], [], []>} : vector<8x32xf32>, vector<32x32xf32>, vector<8x32xf32> -> vector<8x32xf32>
    %cst_20 = arith.constant dense<0.000000e+00> : vector<8x8xf32>
    %30 = tpu.matmul %29, %26, %cst_20 {dimension_numbers = #tpu.dot_dimension_numbers<[1], [1], [0], [0], [0, 0, 1, 0], [], []>} : vector<8x32xf32>, vector<8x32xf32>, vector<8x8xf32> -> vector<8x8xf32>
    %31 = math.tanh %30 : vector<8x8xf32>
    %32 = arith.mulf %31, %3 : vector<8x8xf32>
    %cst_21 = arith.constant dense<0xFF800000> : vector<8xf32>
    %33 = vector.multi_reduction <maximumf>, %32, %cst_21 [1] : vector<8x8xf32> to vector<8xf32>
    %34 = vector.shape_cast %33 : vector<8xf32> to vector<8x1xf32>
    %35 = vector.broadcast %34 : vector<8x1xf32> to vector<8x8xf32>
    %36 = arith.subf %32, %35 : vector<8x8xf32>
    %37 = math.exp %36 : vector<8x8xf32>
    %cst_22 = arith.constant dense<0.000000e+00> : vector<8xf32>
    %38 = vector.multi_reduction <add>, %37, %cst_22 [1] : vector<8x8xf32> to vector<8xf32>
    %39 = vector.shape_cast %38 : vector<8xf32> to vector<8x1xf32>
    %40 = vector.broadcast %39 : vector<8x1xf32> to vector<8x8xf32>
    %41 = arith.divf %37, %40 : vector<8x8xf32>
    %42 = arith.mulf %41, %3 : vector<8x8xf32>
    %cst_23 = arith.constant dense<0.000000e+00> : vector<8xf32>
    %43 = vector.multi_reduction <add>, %42, %cst_23 [1] : vector<8x8xf32> to vector<8xf32>
    %44 = vector.shape_cast %43 : vector<8xf32> to vector<8x1xf32>
    %cst_24 = arith.constant 9.99999982E-14 : f32
    %45 = vector.broadcast %cst_24 : f32 to vector<8x1xf32>
    %46 = arith.addf %44, %45 : vector<8x1xf32>
    %47 = tpu.reciprocal %46 {approx = true} : vector<8x1xf32> -> vector<8x1xf32>
    %48 = vector.broadcast %47 : vector<8x1xf32> to vector<8x8xf32>
    %49 = arith.mulf %42, %48 : vector<8x8xf32>
    %50 = arith.mulf %31, %3 : vector<8x8xf32>
    %cst_25 = arith.constant dense<0xFF800000> : vector<8xf32>
    %51 = vector.multi_reduction <maximumf>, %50, %cst_25 [0] : vector<8x8xf32> to vector<8xf32>
    %52 = vector.shape_cast %51 : vector<8xf32> to vector<1x8xf32>
    %53 = vector.broadcast %52 : vector<1x8xf32> to vector<8x8xf32>
    %54 = arith.subf %50, %53 : vector<8x8xf32>
    %55 = math.exp %54 : vector<8x8xf32>
    %cst_26 = arith.constant dense<0.000000e+00> : vector<8xf32>
    %56 = vector.multi_reduction <add>, %55, %cst_26 [0] : vector<8x8xf32> to vector<8xf32>
    %57 = vector.shape_cast %56 : vector<8xf32> to vector<1x8xf32>
    %58 = vector.broadcast %57 : vector<1x8xf32> to vector<8x8xf32>
    %59 = arith.divf %55, %58 : vector<8x8xf32>
    %60 = arith.mulf %59, %3 : vector<8x8xf32>
    %cst_27 = arith.constant dense<0.000000e+00> : vector<8xf32>
    %61 = vector.multi_reduction <add>, %60, %cst_27 [0] : vector<8x8xf32> to vector<8xf32>
    %62 = vector.shape_cast %61 : vector<8xf32> to vector<1x8xf32>
    %cst_28 = arith.constant 9.99999982E-14 : f32
    %63 = vector.broadcast %cst_28 : f32 to vector<1x8xf32>
    %64 = arith.addf %62, %63 : vector<1x8xf32>
    %65 = tpu.reciprocal %64 {approx = true} : vector<1x8xf32> -> vector<1x8xf32>
    %66 = vector.broadcast %65 : vector<1x8xf32> to vector<8x8xf32>
    %67 = arith.mulf %60, %66 : vector<8x8xf32>
    %68 = vector.extract_strided_slice %8 {offsets = [0, 64], sizes = [16, 32], strides = [1, 1]} : vector<16x96xf32> to vector<16x32xf32>
    %69 = vector.extract_strided_slice %68 {offsets = [8, 0], sizes = [8, 32], strides = [1, 1]} : vector<16x32xf32> to vector<8x32xf32>
    %cst_29 = arith.constant dense<0.000000e+00> : vector<8x32xf32>
    %70 = tpu.matmul %49, %69, %cst_29 {dimension_numbers = #tpu.dot_dimension_numbers<[1], [0], [0], [1], [0, 0, 1, 1], [], []>} : vector<8x8xf32>, vector<8x32xf32>, vector<8x32xf32> -> vector<8x32xf32>
    %71 = vector.extract_strided_slice %68 {offsets = [0, 0], sizes = [8, 32], strides = [1, 1]} : vector<16x32xf32> to vector<8x32xf32>
    %cst_30 = arith.constant dense<0.000000e+00> : vector<8x32xf32>
    %72 = tpu.matmul %67, %71, %cst_30 {dimension_numbers = #tpu.dot_dimension_numbers<[0], [0], [1], [1], [0, 1, 1, 1], [], []>} : vector<8x8xf32>, vector<8x32xf32>, vector<8x32xf32> -> vector<8x32xf32>
    %73 = tpu.concatenate %70, %72 in 0 : vector<8x32xf32>, vector<8x32xf32> -> vector<16x32xf32>
    %74 = arith.addf %24, %73 : vector<16x32xf32>
    %c0_31 = arith.constant 0 : index
    %c0_32 = arith.constant 0 : index
    %c0_33 = arith.constant 0 : index
    %75 = vector.load %arg6[%c0_31, %c0_32, %c0_33] : memref<2x1x32xf32, #tpu.memory_space<vmem>>, vector<1x1x32xf32>
    %76 = vector.shape_cast %75 : vector<1x1x32xf32> to vector<1x32xf32>
    %77 = vector.broadcast %76 : vector<1x32xf32> to vector<16x32xf32>
    %78 = arith.addf %74, %77 : vector<16x32xf32>
    %cst_34 = arith.constant 0.000000e+00 : f32
    %79 = vector.broadcast %cst_34 : f32 to vector<16x32xf32>
    %80 = arith.maximumf %78, %79 : vector<16x32xf32>
    %c1 = arith.constant 1 : index
    %c0_35 = arith.constant 0 : index
    %c0_36 = arith.constant 0 : index
    %81 = vector.load %arg5[%c1, %c0_35, %c0_36] : memref<2x32x96xf32, #tpu.memory_space<vmem>>, vector<1x32x96xf32>
    %82 = vector.shape_cast %81 : vector<1x32x96xf32> to vector<32x96xf32>
    %cst_37 = arith.constant dense<0.000000e+00> : vector<16x96xf32>
    %83 = tpu.matmul %80, %82, %cst_37 {dimension_numbers = #tpu.dot_dimension_numbers<[1], [0], [0], [1], [0, 0, 1, 1], [], []>} : vector<16x32xf32>, vector<32x96xf32>, vector<16x96xf32> -> vector<16x96xf32>
    %cst_38 = arith.constant 0.000000e+00 : f32
    %84 = vector.broadcast %cst_38 : f32 to vector<16x32xf32>
    %85 = vector.extract_strided_slice %5 {offsets = [0, 0, 0], sizes = [1, 16, 16], strides = [1, 1, 1]} : vector<3x16x16xf32> to vector<1x16x16xf32>
    %86 = vector.shape_cast %85 : vector<1x16x16xf32> to vector<16x16xf32>
    %87 = vector.extract_strided_slice %83 {offsets = [0, 0], sizes = [16, 32], strides = [1, 1]} : vector<16x96xf32> to vector<16x32xf32>
    %cst_39 = arith.constant dense<0.000000e+00> : vector<16x32xf32>
    %88 = tpu.matmul %86, %87, %cst_39 {dimension_numbers = #tpu.dot_dimension_numbers<[1], [0], [0], [1], [0, 0, 1, 1], [], []>} : vector<16x16xf32>, vector<16x32xf32>, vector<16x32xf32> -> vector<16x32xf32>
    %89 = arith.addf %84, %88 : vector<16x32xf32>
    %90 = vector.extract_strided_slice %5 {offsets = [1, 0, 0], sizes = [1, 16, 16], strides = [1, 1, 1]} : vector<3x16x16xf32> to vector<1x16x16xf32>
    %91 = vector.shape_cast %90 : vector<1x16x16xf32> to vector<16x16xf32>
    %92 = vector.extract_strided_slice %83 {offsets = [0, 32], sizes = [16, 32], strides = [1, 1]} : vector<16x96xf32> to vector<16x32xf32>
    %cst_40 = arith.constant dense<0.000000e+00> : vector<16x32xf32>
    %93 = tpu.matmul %91, %92, %cst_40 {dimension_numbers = #tpu.dot_dimension_numbers<[1], [0], [0], [1], [0, 0, 1, 1], [], []>} : vector<16x16xf32>, vector<16x32xf32>, vector<16x32xf32> -> vector<16x32xf32>
    %94 = arith.addf %89, %93 : vector<16x32xf32>
    %95 = vector.extract_strided_slice %5 {offsets = [2, 0, 0], sizes = [1, 16, 16], strides = [1, 1, 1]} : vector<3x16x16xf32> to vector<1x16x16xf32>
    %96 = vector.shape_cast %95 : vector<1x16x16xf32> to vector<16x16xf32>
    %97 = vector.extract_strided_slice %83 {offsets = [0, 64], sizes = [16, 32], strides = [1, 1]} : vector<16x96xf32> to vector<16x32xf32>
    %cst_41 = arith.constant dense<0.000000e+00> : vector<16x32xf32>
    %98 = tpu.matmul %96, %97, %cst_41 {dimension_numbers = #tpu.dot_dimension_numbers<[1], [0], [0], [1], [0, 0, 1, 1], [], []>} : vector<16x16xf32>, vector<16x32xf32>, vector<16x32xf32> -> vector<16x32xf32>
    %99 = arith.addf %94, %98 : vector<16x32xf32>
    %100 = vector.extract_strided_slice %80 {offsets = [0, 0], sizes = [8, 32], strides = [1, 1]} : vector<16x32xf32> to vector<8x32xf32>
    %101 = vector.extract_strided_slice %80 {offsets = [8, 0], sizes = [8, 32], strides = [1, 1]} : vector<16x32xf32> to vector<8x32xf32>
    %c1_42 = arith.constant 1 : index
    %c0_43 = arith.constant 0 : index
    %c0_44 = arith.constant 0 : index
    %102 = vector.load %arg4[%c1_42, %c0_43, %c0_44] : memref<2x32x32xf32, #tpu.memory_space<vmem>>, vector<1x32x32xf32>
    %103 = vector.shape_cast %102 : vector<1x32x32xf32> to vector<32x32xf32>
    %cst_45 = arith.constant dense<0.000000e+00> : vector<8x32xf32>
    %104 = tpu.matmul %100, %103, %cst_45 {dimension_numbers = #tpu.dot_dimension_numbers<[1], [0], [0], [1], [0, 0, 1, 1], [], []>} : vector<8x32xf32>, vector<32x32xf32>, vector<8x32xf32> -> vector<8x32xf32>
    %cst_46 = arith.constant dense<0.000000e+00> : vector<8x8xf32>
    %105 = tpu.matmul %104, %101, %cst_46 {dimension_numbers = #tpu.dot_dimension_numbers<[1], [1], [0], [0], [0, 0, 1, 0], [], []>} : vector<8x32xf32>, vector<8x32xf32>, vector<8x8xf32> -> vector<8x8xf32>
    %106 = math.tanh %105 : vector<8x8xf32>
    %107 = arith.mulf %106, %3 : vector<8x8xf32>
    %cst_47 = arith.constant dense<0xFF800000> : vector<8xf32>
    %108 = vector.multi_reduction <maximumf>, %107, %cst_47 [1] : vector<8x8xf32> to vector<8xf32>
    %109 = vector.shape_cast %108 : vector<8xf32> to vector<8x1xf32>
    %110 = vector.broadcast %109 : vector<8x1xf32> to vector<8x8xf32>
    %111 = arith.subf %107, %110 : vector<8x8xf32>
    %112 = math.exp %111 : vector<8x8xf32>
    %cst_48 = arith.constant dense<0.000000e+00> : vector<8xf32>
    %113 = vector.multi_reduction <add>, %112, %cst_48 [1] : vector<8x8xf32> to vector<8xf32>
    %114 = vector.shape_cast %113 : vector<8xf32> to vector<8x1xf32>
    %115 = vector.broadcast %114 : vector<8x1xf32> to vector<8x8xf32>
    %116 = arith.divf %112, %115 : vector<8x8xf32>
    %117 = arith.mulf %116, %3 : vector<8x8xf32>
    %cst_49 = arith.constant dense<0.000000e+00> : vector<8xf32>
    %118 = vector.multi_reduction <add>, %117, %cst_49 [1] : vector<8x8xf32> to vector<8xf32>
    %119 = vector.shape_cast %118 : vector<8xf32> to vector<8x1xf32>
    %cst_50 = arith.constant 9.99999982E-14 : f32
    %120 = vector.broadcast %cst_50 : f32 to vector<8x1xf32>
    %121 = arith.addf %119, %120 : vector<8x1xf32>
    %122 = tpu.reciprocal %121 {approx = true} : vector<8x1xf32> -> vector<8x1xf32>
    %123 = vector.broadcast %122 : vector<8x1xf32> to vector<8x8xf32>
    %124 = arith.mulf %117, %123 : vector<8x8xf32>
    %125 = arith.mulf %106, %3 : vector<8x8xf32>
    %cst_51 = arith.constant dense<0xFF800000> : vector<8xf32>
    %126 = vector.multi_reduction <maximumf>, %125, %cst_51 [0] : vector<8x8xf32> to vector<8xf32>
    %127 = vector.shape_cast %126 : vector<8xf32> to vector<1x8xf32>
    %128 = vector.broadcast %127 : vector<1x8xf32> to vector<8x8xf32>
    %129 = arith.subf %125, %128 : vector<8x8xf32>
    %130 = math.exp %129 : vector<8x8xf32>
    %cst_52 = arith.constant dense<0.000000e+00> : vector<8xf32>
    %131 = vector.multi_reduction <add>, %130, %cst_52 [0] : vector<8x8xf32> to vector<8xf32>
    %132 = vector.shape_cast %131 : vector<8xf32> to vector<1x8xf32>
    %133 = vector.broadcast %132 : vector<1x8xf32> to vector<8x8xf32>
    %134 = arith.divf %130, %133 : vector<8x8xf32>
    %135 = arith.mulf %134, %3 : vector<8x8xf32>
    %cst_53 = arith.constant dense<0.000000e+00> : vector<8xf32>
    %136 = vector.multi_reduction <add>, %135, %cst_53 [0] : vector<8x8xf32> to vector<8xf32>
    %137 = vector.shape_cast %136 : vector<8xf32> to vector<1x8xf32>
    %cst_54 = arith.constant 9.99999982E-14 : f32
    %138 = vector.broadcast %cst_54 : f32 to vector<1x8xf32>
    %139 = arith.addf %137, %138 : vector<1x8xf32>
    %140 = tpu.reciprocal %139 {approx = true} : vector<1x8xf32> -> vector<1x8xf32>
    %141 = vector.broadcast %140 : vector<1x8xf32> to vector<8x8xf32>
    %142 = arith.mulf %135, %141 : vector<8x8xf32>
    %143 = vector.extract_strided_slice %83 {offsets = [0, 64], sizes = [16, 32], strides = [1, 1]} : vector<16x96xf32> to vector<16x32xf32>
    %144 = vector.extract_strided_slice %143 {offsets = [8, 0], sizes = [8, 32], strides = [1, 1]} : vector<16x32xf32> to vector<8x32xf32>
    %cst_55 = arith.constant dense<0.000000e+00> : vector<8x32xf32>
    %145 = tpu.matmul %124, %144, %cst_55 {dimension_numbers = #tpu.dot_dimension_numbers<[1], [0], [0], [1], [0, 0, 1, 1], [], []>} : vector<8x8xf32>, vector<8x32xf32>, vector<8x32xf32> -> vector<8x32xf32>
    %146 = vector.extract_strided_slice %143 {offsets = [0, 0], sizes = [8, 32], strides = [1, 1]} : vector<16x32xf32> to vector<8x32xf32>
    %cst_56 = arith.constant dense<0.000000e+00> : vector<8x32xf32>
    %147 = tpu.matmul %142, %146, %cst_56 {dimension_numbers = #tpu.dot_dimension_numbers<[0], [0], [1], [1], [0, 1, 1, 1], [], []>} : vector<8x8xf32>, vector<8x32xf32>, vector<8x32xf32> -> vector<8x32xf32>
    %148 = tpu.concatenate %145, %147 in 0 : vector<8x32xf32>, vector<8x32xf32> -> vector<16x32xf32>
    %149 = arith.addf %99, %148 : vector<16x32xf32>
    %c1_57 = arith.constant 1 : index
    %c0_58 = arith.constant 0 : index
    %c0_59 = arith.constant 0 : index
    %150 = vector.load %arg6[%c1_57, %c0_58, %c0_59] : memref<2x1x32xf32, #tpu.memory_space<vmem>>, vector<1x1x32xf32>
    %151 = vector.shape_cast %150 : vector<1x1x32xf32> to vector<1x32xf32>
    %152 = vector.broadcast %151 : vector<1x32xf32> to vector<16x32xf32>
    %153 = arith.addf %149, %152 : vector<16x32xf32>
    %cst_60 = arith.constant 0.000000e+00 : f32
    %154 = vector.broadcast %cst_60 : f32 to vector<16x32xf32>
    %155 = arith.maximumf %153, %154 : vector<16x32xf32>
    %c0_61 = arith.constant 0 : index
    %c0_62 = arith.constant 0 : index
    %c0_63 = arith.constant 0 : index
    %156 = vector.load %arg7[%c0_61, %c0_62, %c0_63] : memref<1x16x32xf32, #tpu.memory_space<vmem>>, vector<1x16x32xf32>
    %157 = vector.shape_cast %156 : vector<1x16x32xf32> to vector<16x32xf32>
    %158 = vector.shape_cast %155 : vector<16x32xf32> to vector<1x16x32xf32>
    tpu.vector_store %arg7[%c0_61, %c0_62, %c0_63], %158 {strides = array<i32>} : memref<1x16x32xf32, #tpu.memory_space<vmem>>, vector<1x16x32xf32>,
    return
  }
  func.func @transform_0(%arg0: i32) -> (i32, i32, i32) {
    %c0_i32 = arith.constant 0 : i32
    %c0_i32_0 = arith.constant 0 : i32
    %c0_i32_1 = arith.constant 0 : i32
    return %arg0, %c0_i32, %c0_i32_0 : i32, i32, i32
  }
  func.func @transform_1(%arg0: i32) -> (i32, i32, i32) {
    %c0_i32 = arith.constant 0 : i32
    %c0_i32_0 = arith.constant 0 : i32
    %c0_i32_1 = arith.constant 0 : i32
    return %arg0, %c0_i32, %c0_i32_0 : i32, i32, i32
  }
  func.func @transform_2(%arg0: i32) -> (i32, i32, i32, i32) {
    %c0_i32 = arith.constant 0 : i32
    %c0_i32_0 = arith.constant 0 : i32
    %c0_i32_1 = arith.constant 0 : i32
    %c0_i32_2 = arith.constant 0 : i32
    return %arg0, %c0_i32, %c0_i32_0, %c0_i32_1 : i32, i32, i32, i32
  }
  func.func @transform_3(%arg0: i32) -> (i32, i32, i32) {
    %c0_i32 = arith.constant 0 : i32
    %c0_i32_0 = arith.constant 0 : i32
    %c0_i32_1 = arith.constant 0 : i32
    %c0_i32_2 = arith.constant 0 : i32
    return %c0_i32, %c0_i32_0, %c0_i32_1 : i32, i32, i32
  }
  func.func @transform_4(%arg0: i32) -> (i32, i32, i32) {
    %c0_i32 = arith.constant 0 : i32
    %c0_i32_0 = arith.constant 0 : i32
    %c0_i32_1 = arith.constant 0 : i32
    %c0_i32_2 = arith.constant 0 : i32
    return %c0_i32, %c0_i32_0, %c0_i32_1 : i32, i32, i32
  }
  func.func @transform_5(%arg0: i32) -> (i32, i32, i32) {
    %c0_i32 = arith.constant 0 : i32
    %c0_i32_0 = arith.constant 0 : i32
    %c0_i32_1 = arith.constant 0 : i32
    %c0_i32_2 = arith.constant 0 : i32
    return %c0_i32, %c0_i32_0, %c0_i32_1 : i32, i32, i32
  }
  func.func @transform_6(%arg0: i32) -> (i32, i32, i32) {
    %c0_i32 = arith.constant 0 : i32
    %c0_i32_0 = arith.constant 0 : i32
    %c0_i32_1 = arith.constant 0 : i32
    return %arg0, %c0_i32, %c0_i32_0 : i32, i32, i32
  }
}

</mosaic_0001>

<llo_original>
// kernel: tpu_custom_call.1
$region0: #{tpu_custom_call.1}
  #allocation0 [shape = 'u32[]', space=smem, size = 0x4, offset = 0x4, fixed_abs, tag = 'smem constant byte address 0x4 - core index']
  #allocation1 [shape = 'u32[144,128]{1,0:T(1,128)}', space=vmem, size = 0x12000, scoped, tag = 'internal scratch']
  %s0 = inlined_call_operand.hbm [shape: f32[2,16,32], index: 0, kind: input, shape index: {}]
  %s1 = inlined_call_operand.hbm [shape: f32[2,8,8], index: 1, kind: input, shape index: {}]
  %s2 = inlined_call_operand.hbm [shape: f32[2,3,16,16], index: 2, kind: input, shape index: {}]
  %s3 = inlined_call_operand.hbm [shape: f32[2,32,32], index: 3, kind: input, shape index: {}]
  %s4 = inlined_call_operand.hbm [shape: f32[2,32,96], index: 4, kind: input, shape index: {}]
  %s5 = inlined_call_operand.vmem [shape: f32[2,1,32], index: 5, kind: input, shape index: {}]
  %s6 = inlined_call_operand.hbm [shape: f32[2,16,32], index: 6, kind: output, shape index: {}]
  %s7 = sld [smem:[#allocation0]]
  $region77: #{tpu_custom_call.1} parent=0
    _
  %s9 = ssub.s32 1, %s7
  %s10 = scalar_select 0, %s9, %s7
  $region1: #{tpu_custom_call.1} parent=0
    #allocation2 [shape = 'u8[16384]{0}', space=vmem, size = 0x4000, scoped, tag = 'input window, operand 0']
    #allocation3 [shape = 's32[2]{0}', space=sflag, size = 0x8, scoped, tag = 'scoped memory for tpu_custom_call.1']
    #allocation4 [shape = 's32[2]{0}', space=sflag, size = 0x8, scoped, tag = 'scoped memory for tpu_custom_call.1']
    #allocation5 [shape = 'u8[8192]{0}', space=vmem, size = 0x2000, scoped, tag = 'input window, operand 1']
    #allocation6 [shape = 's32[2]{0}', space=sflag, size = 0x8, scoped, tag = 'scoped memory for tpu_custom_call.1']
    #allocation7 [shape = 'u8[49152]{0}', space=vmem, size = 0xc000, scoped, tag = 'input window, operand 2']
    #allocation8 [shape = 'u8[32768]{0}', space=vmem, size = 0x8000, scoped, tag = 'input window, operand 3, single buffered']
    #allocation9 [shape = 's32[1]{0}', space=sflag, size = 0x4, scoped, tag = 'scoped memory for tpu_custom_call.1']
    #allocation10 [shape = 'u8[32768]{0}', space=vmem, size = 0x8000, scoped, tag = 'input window, operand 4, single buffered']
    #allocation11 [shape = 'u8[16384]{0}', space=vmem, size = 0x4000, scoped, tag = 'output window, operand 0']
    %11 = vsyncpa [#allocation3], 0
    %s12 = scalar_lea.sflag [#allocation3], 1
    %13 = vsyncpa %s12, 0
    %14 = vsyncpa [#allocation6], 0
    %s15 = scalar_lea.sflag [#allocation6], 1
    %16 = vsyncpa %s15, 0
    %17 = vsyncpa [#allocation9], 0
    %18 = vsyncpa [#allocation4], 0
    %s19 = scalar_lea.sflag [#allocation4], 1
    %20 = vsyncpa %s19, 0
    loop: start=0, step=1, limit=4
    $region2: #{tpu_custom_call.1} parent=1 // loop_pre_header
      _
    $region3: #{tpu_custom_call.1} parent=1 // loop_header
      %s22 = sphi 0, %s26
      %p23 = scmp.ge.s32.totalorder %s22, 4
      %s32 = sphi 0, %s34
      %s35 = sphi 0, %s32
      %s36 = sphi 0, %s35
      %s52 = sphi 0, %s36
      %s58 = sphi 0, %s60
      %s61 = sphi 0, %s58
      %s62 = sphi 0, %s61
      %s78 = sphi 0, %s62
      %s84 = sphi 0, %s86
      %s87 = sphi 0, %s84
      %s88 = sphi 0, %s87
      %s104 = sphi 0, %s88
      %s108 = sphi 0, %s108
      %s110 = sphi 0, %s108
      %s111 = sphi 0, %s110
      %s125 = sphi 0, %s111
      %s129 = sphi 0, %s129
      %s131 = sphi 0, %s129
      %s132 = sphi 0, %s131
      %s146 = sphi 0, %s132
      %s150 = sphi 0, %s150
      %s152 = sphi 0, %s150
      %s153 = sphi 0, %s152
      %s167 = sphi 0, %s153
      %s173 = sphi 0, %s175
      %s176 = sphi 0, %s173
      %s177 = sphi 0, %s176
      %s193 = sphi 0, %s177
    $region4: #{tpu_custom_call.1} parent=1 // loop_header_branch
      %25 = sbr.rel (%p23) target = $region8
    $region5: #{tpu_custom_call.1} parent=1 // loop_body
      %s27 = ssub.s32 %s22, 1
      %s28 = ssub.s32 %s22, 2
      %s29 = sadd.s32 %s22, 1
      %s30 = ssub.s32 %s22, %s29
      %p31 = scmp.eq.s32.totalorder %s30, 0
      %s33 = sadd.s32 %s32, 1
      %s34 = scalar_select %p31, %s32, %s33
      %p37 = pneg %p31
      %p38 = scmp.eq.s32.totalorder %s22, 1
      %p39 = por %p37, %p38
      %p40 = scmp.ne.s32.totalorder %s32, %s35
      %p41 = scmp.eq.s32.totalorder %s22, 0
      %p42 = por %p40, %p41
      %p43 = scmp.ne.s32.totalorder %s32, %s35
      %p44 = scmp.eq.s32.totalorder %s27, 1
      %p45 = por %p43, %p44
      %p46 = scmp.ne.s32.totalorder %s35, %s36
      %p47 = scmp.eq.s32.totalorder %s27, 0
      %p48 = por %p46, %p47
      %p49 = scmp.ne.s32.totalorder %s35, %s36
      %p50 = scmp.eq.s32.totalorder %s28, 1
      %p51 = por %p49, %p50
      %p53 = scmp.ne.s32.totalorder %s36, %s52
      %p54 = scmp.eq.s32.totalorder %s28, 0
      %p55 = por %p53, %p54
      %s56 = ssub.s32 %s22, %s29
      %p57 = scmp.eq.s32.totalorder %s56, 0
      %s59 = sadd.s32 %s58, 1
      %s60 = scalar_select %p57, %s58, %s59
      %p63 = pneg %p57
      %p64 = scmp.eq.s32.totalorder %s22, 1
      %p65 = por %p63, %p64
      %p66 = scmp.ne.s32.totalorder %s58, %s61
      %p67 = scmp.eq.s32.totalorder %s22, 0
      %p68 = por %p66, %p67
      %p69 = scmp.ne.s32.totalorder %s58, %s61
      %p70 = scmp.eq.s32.totalorder %s27, 1
      %p71 = por %p69, %p70
      %p72 = scmp.ne.s32.totalorder %s61, %s62
      %p73 = scmp.eq.s32.totalorder %s27, 0
      %p74 = por %p72, %p73
      %p75 = scmp.ne.s32.totalorder %s61, %s62
      %p76 = scmp.eq.s32.totalorder %s28, 1
      %p77 = por %p75, %p76
      %p79 = scmp.ne.s32.totalorder %s62, %s78
      %p80 = scmp.eq.s32.totalorder %s28, 0
      %p81 = por %p79, %p80
      %s82 = ssub.s32 %s22, %s29
      %p83 = scmp.eq.s32.totalorder %s82, 0
      %s85 = sadd.s32 %s84, 1
      %s86 = scalar_select %p83, %s84, %s85
      %p89 = pneg %p83
      %p90 = scmp.eq.s32.totalorder %s22, 1
      %p91 = por %p89, %p90
      %p92 = scmp.ne.s32.totalorder %s84, %s87
      %p93 = scmp.eq.s32.totalorder %s22, 0
      %p94 = por %p92, %p93
      %p95 = scmp.ne.s32.totalorder %s84, %s87
      %p96 = scmp.eq.s32.totalorder %s27, 1
      %p97 = por %p95, %p96
      %p98 = scmp.ne.s32.totalorder %s87, %s88
      %p99 = scmp.eq.s32.totalorder %s27, 0
      %p100 = por %p98, %p99
      %p101 = scmp.ne.s32.totalorder %s87, %s88
      %p102 = scmp.eq.s32.totalorder %s28, 1
      %p103 = por %p101, %p102
      %p105 = scmp.ne.s32.totalorder %s88, %s104
      %p106 = scmp.eq.s32.totalorder %s28, 0
      %p107 = por %p105, %p106
      %s109 = sadd.s32 %s108, 1
      %p112 = scmp.eq.s32.totalorder %s22, 1
      %p113 = scmp.ne.s32.totalorder %s108, %s110
      %p114 = scmp.eq.s32.totalorder %s22, 0
      %p115 = por %p113, %p114
      %p116 = scmp.ne.s32.totalorder %s108, %s110
      %p117 = scmp.eq.s32.totalorder %s27, 1
      %p118 = por %p116, %p117
      %p119 = scmp.ne.s32.totalorder %s110, %s111
      %p120 = scmp.eq.s32.totalorder %s27, 0
      %p121 = por %p119, %p120
      %p122 = scmp.ne.s32.totalorder %s110, %s111
      %p123 = scmp.eq.s32.totalorder %s28, 1
      %p124 = por %p122, %p123
      %p126 = scmp.ne.s32.totalorder %s111, %s125
      %p127 = scmp.eq.s32.totalorder %s28, 0
      %p128 = por %p126, %p127
      %s130 = sadd.s32 %s129, 1
      %p133 = scmp.eq.s32.totalorder %s22, 1
      %p134 = scmp.ne.s32.totalorder %s129, %s131
      %p135 = scmp.eq.s32.totalorder %s22, 0
      %p136 = por %p134, %p135
      %p137 = scmp.ne.s32.totalorder %s129, %s131
      %p138 = scmp.eq.s32.totalorder %s27, 1
      %p139 = por %p137, %p138
      %p140 = scmp.ne.s32.totalorder %s131, %s132
      %p141 = scmp.eq.s32.totalorder %s27, 0
      %p142 = por %p140, %p141
      %p143 = scmp.ne.s32.totalorder %s131, %s132
      %p144 = scmp.eq.s32.totalorder %s28, 1
      %p145 = por %p143, %p144
      %p147 = scmp.ne.s32.totalorder %s132, %s146
      %p148 = scmp.eq.s32.totalorder %s28, 0
      %p149 = por %p147, %p148
      %s151 = sadd.s32 %s150, 1
      %p154 = scmp.eq.s32.totalorder %s22, 1
      %p155 = scmp.ne.s32.totalorder %s150, %s152
      %p156 = scmp.eq.s32.totalorder %s22, 0
      %p157 = por %p155, %p156
      %p158 = scmp.ne.s32.totalorder %s150, %s152
      %p159 = scmp.eq.s32.totalorder %s27, 1
      %p160 = por %p158, %p159
      %p161 = scmp.ne.s32.totalorder %s152, %s153
      %p162 = scmp.eq.s32.totalorder %s27, 0
      %p163 = por %p161, %p162
      %p164 = scmp.ne.s32.totalorder %s152, %s153
      %p165 = scmp.eq.s32.totalorder %s28, 1
      %p166 = por %p164, %p165
      %p168 = scmp.ne.s32.totalorder %s153, %s167
      %p169 = scmp.eq.s32.totalorder %s28, 0
      %p170 = por %p168, %p169
      %s171 = ssub.s32 %s22, %s29
      %p172 = scmp.eq.s32.totalorder %s171, 0
      %s174 = sadd.s32 %s173, 1
      %s175 = scalar_select %p172, %s173, %s174
      %p178 = pneg %p172
      %p179 = scmp.eq.s32.totalorder %s22, 1
      %p180 = por %p178, %p179
      %p181 = scmp.ne.s32.totalorder %s173, %s176
      %p182 = scmp.eq.s32.totalorder %s22, 0
      %p183 = por %p181, %p182
      %p184 = scmp.ne.s32.totalorder %s173, %s176
      %p185 = scmp.eq.s32.totalorder %s27, 1
      %p186 = por %p184, %p185
      %p187 = scmp.ne.s32.totalorder %s176, %s177
      %p188 = scmp.eq.s32.totalorder %s27, 0
      %p189 = por %p187, %p188
      %p190 = scmp.ne.s32.totalorder %s176, %s177
      %p191 = scmp.eq.s32.totalorder %s28, 1
      %p192 = por %p190, %p191
      %p194 = scmp.ne.s32.totalorder %s177, %s193
      %p195 = scmp.eq.s32.totalorder %s28, 0
      %p196 = por %p194, %p195
      %p197 = scmp.le.s32.totalorder 1, %s22
      %p198 = scmp.lt.s32.totalorder %s22, 3
      %p199 = pnand %p197, %p198
      %p200 = pneg %p199
      // Predicated region
      $region9: #{tpu_custom_call.1} parent=5 // pred_check
        _
      $region10: #{tpu_custom_call.1} parent=5 // pred_check_branch
        %202 = sbr.rel (%p199) target = $region12
      $region11: #{tpu_custom_call.1} parent=5 // pred_region
        %s203 = ssub.s32 %s22, 1
        // Predicated region
        $region13: #{tpu_custom_call.1} parent=11 // pred_check
          %p204 = pneg %p121
        $region14: #{tpu_custom_call.1} parent=11 // pred_check_branch
          %206 = sbr.rel (%p204) target = $region16
        $region15: #{tpu_custom_call.1} parent=11 // pred_region
          %s208 = ssub.s32 1024, 1024
          %209 = vsyncadd [#allocation9], %s208
          %s210 = sshll.u32 [#allocation8], 4
          %s211 = int_to_ptr.vmem [resolvable:$true] %s210
          %216 = dma.hbm_to_vmem [thread:$0]  %s3, 1024, %s211, [#allocation9], 128, 128, 8
        $region16: #{tpu_custom_call.1} parent=11 // pred_fallthru
          _
        // Predicated region
        $region17: #{tpu_custom_call.1} parent=11 // pred_check
          %p217 = pneg %p142
        $region18: #{tpu_custom_call.1} parent=11 // pred_check_branch
          %219 = sbr.rel (%p217) target = $region20
        $region19: #{tpu_custom_call.1} parent=11 // pred_region
          %s221 = ssub.s32 1024, 1024
          %222 = vsyncadd [#allocation9], %s221
          %s223 = sshll.u32 [#allocation10], 4
          %s224 = int_to_ptr.vmem [resolvable:$true] %s223
          %229 = dma.hbm_to_vmem [thread:$0]  %s4, 1024, %s224, [#allocation9], 128, 128, 8
        $region20: #{tpu_custom_call.1} parent=11 // pred_fallthru
          _
        // Predicated region
        $region21: #{tpu_custom_call.1} parent=11 // pred_check
          %p230 = pneg %p163
        $region22: #{tpu_custom_call.1} parent=11 // pred_check_branch
          %232 = sbr.rel (%p230) target = $region24
        $region23: #{tpu_custom_call.1} parent=11 // pred_region
          _
        $region24: #{tpu_custom_call.1} parent=11 // pred_fallthru
          _
      $region12: #{tpu_custom_call.1} parent=5 // pred_fallthru
        _
      %p233 = scmp.lt.s32.totalorder %s22, 2
      // Predicated region
      $region25: #{tpu_custom_call.1} parent=5 // pred_check
        %p234 = pneg %p233
      $region26: #{tpu_custom_call.1} parent=5 // pred_check_branch
        %236 = sbr.rel (%p234) target = $region28
      $region27: #{tpu_custom_call.1} parent=5 // pred_region
        // Predicated region
        $region29: #{tpu_custom_call.1} parent=27 // pred_check
          %p237 = pneg %p42
        $region30: #{tpu_custom_call.1} parent=27 // pred_check_branch
          %239 = sbr.rel (%p237) target = $region32
        $region31: #{tpu_custom_call.1} parent=27 // pred_region
          %s240 = sand.u32 %s32, 1
          %s241 = scalar_lea.sflag [#allocation3], %s240
          %s242 = sand.u32 %s32, 1
          %s243 = smul.addr %s242, 16
          %s244 = scalar_lea.vmem [#allocation2], %s243
          %s246 = ssub.s32 256, 256
          %247 = vsyncadd %s241, %s246
          %s248 = smul.addr %s22, 2
          %s249 = smul.addr %s248, 128
          %s250 = scalar_lea.hbm %s0, %s249
          %s251 = sshll.u32 %s244, 4
          %s252 = int_to_ptr.vmem [resolvable:$true] %s251
          %257 = dma.hbm_to_vmem [thread:$0]  %s250, 256, %s252, %s241, 128, 128, 8
        $region32: #{tpu_custom_call.1} parent=27 // pred_fallthru
          _
        // Predicated region
        $region33: #{tpu_custom_call.1} parent=27 // pred_check
          %p258 = pneg %p68
        $region34: #{tpu_custom_call.1} parent=27 // pred_check_branch
          %260 = sbr.rel (%p258) target = $region36
        $region35: #{tpu_custom_call.1} parent=27 // pred_region
          %s261 = sand.u32 %s22, 1
          %s262 = scalar_lea.sflag [#allocation6], %s261
          %s263 = sand.u32 %s58, 1
          %s264 = smul.addr %s263, 8
          %s265 = scalar_lea.vmem [#allocation5], %s264
          %s267 = ssub.s32 128, 128
          %268 = vsyncadd %s262, %s267
          %s269 = smul.addr %s22, 128
          %s270 = scalar_lea.hbm %s1, %s269
          %s272 = sshll.u32 %s265, 4
          %s273 = int_to_ptr.vmem [resolvable:$true] %s272
          %275 = dma.hbm_to_vmem [thread:$0]  %s270, 128, %s273, %s262
        $region36: #{tpu_custom_call.1} parent=27 // pred_fallthru
          _
        // Predicated region
        $region37: #{tpu_custom_call.1} parent=27 // pred_check
          %p276 = pneg %p94
        $region38: #{tpu_custom_call.1} parent=27 // pred_check_branch
          %278 = sbr.rel (%p276) target = $region40
        $region39: #{tpu_custom_call.1} parent=27 // pred_region
          %s279 = sand.u32 %s22, 1
          %s280 = scalar_lea.sflag [#allocation6], %s279
          %s281 = sand.u32 %s84, 1
          %s282 = smul.addr %s281, 48
          %s283 = scalar_lea.vmem [#allocation7], %s282
          %s285 = ssub.s32 768, 768
          %286 = vsyncadd %s280, %s285
          %s287 = smul.addr %s22, 6
          %s288 = smul.addr %s287, 128
          %s289 = scalar_lea.hbm %s2, %s288
          %s290 = sshll.u32 %s283, 4
          %s291 = int_to_ptr.vmem [resolvable:$true] %s290
          %296 = dma.hbm_to_vmem [thread:$0]  %s289, 768, %s291, %s280, 128, 128, 8
        $region40: #{tpu_custom_call.1} parent=27 // pred_fallthru
          _
      $region28: #{tpu_custom_call.1} parent=5 // pred_fallthru
        _
      %p297 = scmp.le.s32.totalorder 1, %s22
      %p298 = scmp.lt.s32.totalorder %s22, 3
      %p299 = pnand %p297, %p298
      %p300 = pneg %p299
      // Predicated region
      $region41: #{tpu_custom_call.1} parent=5 // pred_check
        _
      $region42: #{tpu_custom_call.1} parent=5 // pred_check_branch
        %302 = sbr.rel (%p299) target = $region44
      $region43: #{tpu_custom_call.1} parent=5 // pred_region
        %s303 = ssub.s32 %s22, 1
        %s304 = sand.u32 %s35, 1
        %s305 = scalar_lea.sflag [#allocation3], %s304
        %s306 = sand.u32 %s35, 1
        %s307 = smul.addr %s306, 16
        %s308 = scalar_lea.vmem [#allocation2], %s307
        // Predicated region
        $region45: #{tpu_custom_call.1} parent=43 // pred_check
          %p309 = pneg %p48
        $region46: #{tpu_custom_call.1} parent=43 // pred_check_branch
          %311 = sbr.rel (%p309) target = $region48
        $region47: #{tpu_custom_call.1} parent=43 // pred_region
          %312 = dma.done %s305, 256
        $region48: #{tpu_custom_call.1} parent=43 // pred_fallthru
          _
        %s313 = sand.u32 %s27, 1
        %s314 = scalar_lea.sflag [#allocation6], %s313
        %s315 = sand.u32 %s61, 1
        %s316 = smul.addr %s315, 8
        %s317 = scalar_lea.vmem [#allocation5], %s316
        // Predicated region
        $region49: #{tpu_custom_call.1} parent=43 // pred_check
          %p318 = pneg %p74
        $region50: #{tpu_custom_call.1} parent=43 // pred_check_branch
          %320 = sbr.rel (%p318) target = $region52
        $region51: #{tpu_custom_call.1} parent=43 // pred_region
          %321 = dma.done %s314, 128
        $region52: #{tpu_custom_call.1} parent=43 // pred_fallthru
          _
        %s322 = sand.u32 %s27, 1
        %s323 = scalar_lea.sflag [#allocation6], %s322
        %s324 = sand.u32 %s87, 1
        %s325 = smul.addr %s324, 48
        %s326 = scalar_lea.vmem [#allocation7], %s325
        // Predicated region
        $region53: #{tpu_custom_call.1} parent=43 // pred_check
          %p327 = pneg %p100
        $region54: #{tpu_custom_call.1} parent=43 // pred_check_branch
          %329 = sbr.rel (%p327) target = $region56
        $region55: #{tpu_custom_call.1} parent=43 // pred_region
          %330 = dma.done %s323, 768
        $region56: #{tpu_custom_call.1} parent=43 // pred_fallthru
          _
        // Predicated region
        $region57: #{tpu_custom_call.1} parent=43 // pred_check
          %p331 = pneg %p121
        $region58: #{tpu_custom_call.1} parent=43 // pred_check_branch
          %333 = sbr.rel (%p331) target = $region60
        $region59: #{tpu_custom_call.1} parent=43 // pred_region
          %334 = dma.done [#allocation9], 1024
        $region60: #{tpu_custom_call.1} parent=43 // pred_fallthru
          _
        // Predicated region
        $region61: #{tpu_custom_call.1} parent=43 // pred_check
          %p335 = pneg %p142
        $region62: #{tpu_custom_call.1} parent=43 // pred_check_branch
          %337 = sbr.rel (%p335) target = $region64
        $region63: #{tpu_custom_call.1} parent=43 // pred_region
          %338 = dma.done [#allocation9], 1024
        $region64: #{tpu_custom_call.1} parent=43 // pred_fallthru
          _
        %s339 = sand.u32 %s35, 1
        %s340 = scalar_lea.sflag [#allocation3], %s339
        %s341 = sand.u32 %s35, 1
        %s342 = smul.addr %s341, 16
        %s343 = scalar_lea.vmem [#allocation2], %s342
        %p344 = pneg %p48
        %p345 = pneg %p45
        %s346 = sand.u32 %s27, 1
        %s347 = scalar_lea.sflag [#allocation6], %s346
        %s348 = sand.u32 %s61, 1
        %s349 = smul.addr %s348, 8
        %s350 = scalar_lea.vmem [#allocation5], %s349
        %p351 = pneg %p74
        %p352 = pneg %p71
        %s353 = sand.u32 %s27, 1
        %s354 = scalar_lea.sflag [#allocation6], %s353
        %s355 = sand.u32 %s87, 1
        %s356 = smul.addr %s355, 48
        %s357 = scalar_lea.vmem [#allocation7], %s356
        %p358 = pneg %p100
        %p359 = pneg %p97
        %p360 = pneg %p121
        %p361 = pneg %p118
        %p362 = pneg %p142
        %p363 = pneg %p139
        %p364 = pneg %p163
        %p365 = pneg %p160
        %p366 = pneg %p189
        %p367 = pneg %p186
        %s368 = sand.u32 %s176, 1
        %s369 = scalar_lea.sflag [#allocation4], %s368
        %s370 = sand.u32 %s176, 1
        %s371 = smul.addr %s370, 16
        %s372 = scalar_lea.vmem [#allocation11], %s371
        %v373 = vld [vmem:[%s308] sm:$0xff]
        %v374 = vld [vmem:[%s308 + $0x8] sm:$0xff]
        %v375 = vld [vmem:[%s317] sm:$0xff]
        %v376 = vld [vmem:[%s326] sm:$0xff]
        %v377 = vld [vmem:[%s326 + $0x8] sm:$0xff]
        %v378 = vld [vmem:[%s326 + $0x10] sm:$0xff]
        %v379 = vld [vmem:[%s326 + $0x18] sm:$0xff]
        %v380 = vld [vmem:[%s326 + $0x20] sm:$0xff]
        %v381 = vld [vmem:[%s326 + $0x28] sm:$0xff]
        %v382 = vld [vmem:[#allocation10] sm:$0xff]
        %v383 = vld [vmem:[#allocation10 + $0x8] sm:$0xff]
        %v384 = vld [vmem:[#allocation10 + $0x10] sm:$0xff]
        %v385 = vld [vmem:[#allocation10 + $0x18] sm:$0xff]
        %vm386 = vcmask 261120
        %v388 = vsel %vm386, %v373, 0
        %v391 = vsel %vm386, %v374, 0
        %393 = vmatprep.subr.mxu0 0.0
        %394 = vmatpush1.msra.mxu0 %v382
        %395 = vmatprep.subr.mxu0 0.0
        %396 = vmatpush1.msra.mxu0 %v383
        %397 = vmatprep.subr.mxu0 0.0
        %398 = vmatpush1.msra.mxu0 %v384
        %399 = vmatprep.subr.mxu0 0.0
        %400 = vmatpush1.msra.mxu0 %v385
        %401 = vmatprep.subr.mxu0 0.0
        %402 = vmatpush1.msra.mxu0 0.0
        %403 = vmatprep.subr.mxu0 0.0
        %404 = vmatpush1.msra.mxu0 0.0
        %405 = vmatprep.subr.mxu0 0.0
        %406 = vmatpush1.msra.mxu0 0.0
        %407 = vmatprep.subr.mxu0 0.0
        %408 = vmatpush1.msra.mxu0 0.0
        %409 = vmatprep.subr.mxu0 0.0
        %410 = vmatpush1.msra.mxu0 0.0
        %411 = vmatprep.subr.mxu0 0.0
        %412 = vmatpush1.msra.mxu0 0.0
        %413 = vmatprep.subr.mxu0 0.0
        %414 = vmatpush1.msra.mxu0 0.0
        %415 = vmatprep.subr.mxu0 0.0
        %416 = vmatpush1.msra.mxu0 0.0
        %417 = vmatprep.subr.mxu0 0.0
        %418 = vmatpush1.msra.mxu0 0.0
        %419 = vmatprep.subr.mxu0 0.0
        %420 = vmatpush1.msra.mxu0 0.0
        %421 = vmatprep.subr.mxu0 0.0
        %422 = vmatpush1.msra.mxu0 0.0
        %423 = vmatprep.subr.mxu0 0.0
        %424 = vmatpush1.msra.mxu0 0.0
        %425 = vmatprep.subr.mxu0 0.0
        %426 = vmatpush1.msra.mxu0 0.0
        %427 = vmatprep.subr.mxu0 0.0
        %428 = vmatpush1.msra.mxu0 0.0
        %429 = vmatprep.subr.mxu0 0.0
        %430 = vmatpush1.msra.mxu0 0.0
        %431 = vmatprep.subr.mxu0 0.0
        %432 = vmatpush1.msra.mxu0 0.0
        %433 = vmatprep.subr.mxu0 0.0
        %434 = vmatpush1.msra.mxu0 0.0
        %435 = vmatprep.subr.mxu0 0.0
        %436 = vmatpush1.msra.mxu0 0.0
        %437 = vmatprep.subr.mxu0 0.0
        %438 = vmatpush1.msra.mxu0 0.0
        %439 = vmatprep.subr.mxu0 0.0
        %440 = vmatpush1.msra.mxu0 0.0
        %441 = vmatprep.subr.mxu0 0.0
        %442 = vmatpush1.msra.mxu0 0.0
        %443 = vmatprep.subr.mxu0 0.0
        %444 = vmatpush1.msra.mxu0 0.0
        %445 = vmatprep.subr.mxu0 0.0
        %446 = vmatpush1.msra.mxu0 0.0
        %447 = vmatprep.subr.mxu0 0.0
        %448 = vmatpush1.msra.mxu0 0.0
        %449 = vmatprep.subr.mxu0 0.0
        %450 = vmatpush1.msra.mxu0 0.0
        %451 = vmatprep.subr.mxu0 0.0
        %452 = vmatpush1.msra.mxu0 0.0
        %453 = vmatprep.subr.mxu0 0.0
        %454 = vmatpush1.msra.mxu0 0.0
        %455 = vmatprep.subr.mxu0 0.0
        %456 = vmatpush1.msra.mxu0 0.0
        %457 = vmatprep.mubr.f32.mxu0 0.0
        %458 = vmatmul.mubr.f32.gmra.mrb[0].mxu0 %v388
        %v459 = vpop.f32.mrb[0].mxu0
        %v460 = vadd.f32 0.0, %v459
        %v461 = vpop.f32.mrb[0].mxu0
        %462 = vmatprep.mubr.f32.mxu0 0.0
        %463 = vmatmul.mubr.f32.gmra.mrb[0].mxu0 %v391
        %v464 = vpop.f32.mrb[0].mxu0
        %v465 = vadd.f32 0.0, %v464
        %v466 = vpop.f32.mrb[0].mxu0
        %467 = vdwg.mxu0
        %470 = vrot.lane.b32.xlu0 %v460, 96
        %v471 = vpop.permute.xlu0 %470
        %472 = vrot.lane.b32.xlu0 %v465, 96
        %v473 = vpop.permute.xlu0 %472
        %vm476 = vcmask 130048
        %v478 = vsel %vm476, %v378, 0
        %v481 = vsel %vm476, %v379, 0
        %483 = vmatprep.subr.mxu0 0.0
        %484 = vmatpush1.msra.mxu0 %v471
        %485 = vmatprep.subr.mxu0 0.0
        %486 = vmatpush1.msra.mxu0 %v473
        %487 = vmatprep.subr.mxu0 0.0
        %488 = vmatpush1.msra.mxu0 0.0
        %489 = vmatprep.subr.mxu0 0.0
        %490 = vmatpush1.msra.mxu0 0.0
        %491 = vmatprep.subr.mxu0 0.0
        %492 = vmatpush1.msra.mxu0 0.0
        %493 = vmatprep.subr.mxu0 0.0
        %494 = vmatpush1.msra.mxu0 0.0
        %495 = vmatprep.subr.mxu0 0.0
        %496 = vmatpush1.msra.mxu0 0.0
        %497 = vmatprep.subr.mxu0 0.0
        %498 = vmatpush1.msra.mxu0 0.0
        %499 = vmatprep.subr.mxu0 0.0
        %500 = vmatpush1.msra.mxu0 0.0
        %501 = vmatprep.subr.mxu0 0.0
        %502 = vmatpush1.msra.mxu0 0.0
        %503 = vmatprep.subr.mxu0 0.0
        %504 = vmatpush1.msra.mxu0 0.0
        %505 = vmatprep.subr.mxu0 0.0
        %506 = vmatpush1.msra.mxu0 0.0
        %507 = vmatprep.subr.mxu0 0.0
        %508 = vmatpush1.msra.mxu0 0.0
        %509 = vmatprep.subr.mxu0 0.0
        %510 = vmatpush1.msra.mxu0 0.0
        %511 = vmatprep.subr.mxu0 0.0
        %512 = vmatpush1.msra.mxu0 0.0
        %513 = vmatprep.subr.mxu0 0.0
        %514 = vmatpush1.msra.mxu0 0.0
        %515 = vmatprep.subr.mxu0 0.0
        %516 = vmatpush1.msra.mxu0 0.0
        %517 = vmatprep.subr.mxu0 0.0
        %518 = vmatpush1.msra.mxu0 0.0
        %519 = vmatprep.subr.mxu0 0.0
        %520 = vmatpush1.msra.mxu0 0.0
        %521 = vmatprep.subr.mxu0 0.0
        %522 = vmatpush1.msra.mxu0 0.0
        %523 = vmatprep.subr.mxu0 0.0
        %524 = vmatpush1.msra.mxu0 0.0
        %525 = vmatprep.subr.mxu0 0.0
        %526 = vmatpush1.msra.mxu0 0.0
        %527 = vmatprep.subr.mxu0 0.0
        %528 = vmatpush1.msra.mxu0 0.0
        %529 = vmatprep.subr.mxu0 0.0
        %530 = vmatpush1.msra.mxu0 0.0
        %531 = vmatprep.subr.mxu0 0.0
        %532 = vmatpush1.msra.mxu0 0.0
        %533 = vmatprep.subr.mxu0 0.0
        %534 = vmatpush1.msra.mxu0 0.0
        %535 = vmatprep.subr.mxu0 0.0
        %536 = vmatpush1.msra.mxu0 0.0
        %537 = vmatprep.subr.mxu0 0.0
        %538 = vmatpush1.msra.mxu0 0.0
        %539 = vmatprep.subr.mxu0 0.0
        %540 = vmatpush1.msra.mxu0 0.0
        %541 = vmatprep.subr.mxu0 0.0
        %542 = vmatpush1.msra.mxu0 0.0
        %543 = vmatprep.subr.mxu0 0.0
        %544 = vmatpush1.msra.mxu0 0.0
        %545 = vmatprep.subr.mxu0 0.0
        %546 = vmatpush1.msra.mxu0 0.0
        %547 = vmatprep.mubr.f32.mxu0 0.0
        %548 = vmatmul.mubr.f32.gmra.mrb[0].mxu0 %v478
        %v549 = vpop.f32.mrb[0].mxu0
        %v550 = vadd.f32 0.0, %v549
        %v551 = vpop.f32.mrb[0].mxu0
        %552 = vmatprep.mubr.f32.mxu0 0.0
        %553 = vmatmul.mubr.f32.gmra.mrb[0].mxu0 %v481
        %v554 = vpop.f32.mrb[0].mxu0
        %v555 = vadd.f32 0.0, %v554
        %v556 = vpop.f32.mrb[0].mxu0
        %557 = vdwg.mxu0
        %v559 = vsel %vm476, %v376, 0
        %v562 = vsel %vm476, %v377, 0
        %564 = vmatprep.subr.mxu0 0.0
        %565 = vmatpush1.msra.mxu0 %v460
        %566 = vmatprep.subr.mxu0 0.0
        %567 = vmatpush1.msra.mxu0 %v465
        %568 = vmatprep.subr.mxu0 0.0
        %569 = vmatpush1.msra.mxu0 0.0
        %570 = vmatprep.subr.mxu0 0.0
        %571 = vmatpush1.msra.mxu0 0.0
        %572 = vmatprep.subr.mxu0 0.0
        %573 = vmatpush1.msra.mxu0 0.0
        %574 = vmatprep.subr.mxu0 0.0
        %575 = vmatpush1.msra.mxu0 0.0
        %576 = vmatprep.subr.mxu0 0.0
        %577 = vmatpush1.msra.mxu0 0.0
        %578 = vmatprep.subr.mxu0 0.0
        %579 = vmatpush1.msra.mxu0 0.0
        %580 = vmatprep.subr.mxu0 0.0
        %581 = vmatpush1.msra.mxu0 0.0
        %582 = vmatprep.subr.mxu0 0.0
        %583 = vmatpush1.msra.mxu0 0.0
        %584 = vmatprep.subr.mxu0 0.0
        %585 = vmatpush1.msra.mxu0 0.0
        %586 = vmatprep.subr.mxu0 0.0
        %587 = vmatpush1.msra.mxu0 0.0
        %588 = vmatprep.subr.mxu0 0.0
        %589 = vmatpush1.msra.mxu0 0.0
        %590 = vmatprep.subr.mxu0 0.0
        %591 = vmatpush1.msra.mxu0 0.0
        %592 = vmatprep.subr.mxu0 0.0
        %593 = vmatpush1.msra.mxu0 0.0
        %594 = vmatprep.subr.mxu0 0.0
        %595 = vmatpush1.msra.mxu0 0.0
        %596 = vmatprep.subr.mxu0 0.0
        %597 = vmatpush1.msra.mxu0 0.0
        %598 = vmatprep.subr.mxu0 0.0
        %599 = vmatpush1.msra.mxu0 0.0
        %600 = vmatprep.subr.mxu0 0.0
        %601 = vmatpush1.msra.mxu0 0.0
        %602 = vmatprep.subr.mxu0 0.0
        %603 = vmatpush1.msra.mxu0 0.0
        %604 = vmatprep.subr.mxu0 0.0
        %605 = vmatpush1.msra.mxu0 0.0
        %606 = vmatprep.subr.mxu0 0.0
        %607 = vmatpush1.msra.mxu0 0.0
        %608 = vmatprep.subr.mxu0 0.0
        %609 = vmatpush1.msra.mxu0 0.0
        %610 = vmatprep.subr.mxu0 0.0
        %611 = vmatpush1.msra.mxu0 0.0
        %612 = vmatprep.subr.mxu0 0.0
        %613 = vmatpush1.msra.mxu0 0.0
        %614 = vmatprep.subr.mxu0 0.0
        %615 = vmatpush1.msra.mxu0 0.0
        %616 = vmatprep.subr.mxu0 0.0
        %617 = vmatpush1.msra.mxu0 0.0
        %618 = vmatprep.subr.mxu0 0.0
        %619 = vmatpush1.msra.mxu0 0.0
        %620 = vmatprep.subr.mxu0 0.0
        %621 = vmatpush1.msra.mxu0 0.0
        %622 = vmatprep.subr.mxu0 0.0
        %623 = vmatpush1.msra.mxu0 0.0
        %624 = vmatprep.subr.mxu0 0.0
        %625 = vmatpush1.msra.mxu0 0.0
        %626 = vmatprep.subr.mxu0 0.0
        %627 = vmatpush1.msra.mxu0 0.0
        %628 = vmatprep.mubr.f32.mxu0 0.0
        %629 = vmatmul.mubr.f32.gmra.mrb[0].mxu0 %v559
        %v630 = vpop.f32.mrb[0].mxu0
        %v631 = vadd.f32 %v550, %v630
        %v632 = vpop.f32.mrb[0].mxu0
        %633 = vmatprep.mubr.f32.mxu0 0.0
        %634 = vmatmul.mubr.f32.gmra.mrb[0].mxu0 %v562
        %v635 = vpop.f32.mrb[0].mxu0
        %v636 = vadd.f32 %v555, %v635
        %v637 = vpop.f32.mrb[0].mxu0
        %638 = vdwg.mxu0
        %639 = vrot.lane.b32.xlu0 %v460, 64
        %v640 = vpop.permute.xlu0 %639
        %641 = vrot.lane.b32.xlu0 %v465, 64
        %v642 = vpop.permute.xlu0 %641
        %v646 = vsel %vm476, %v380, 0
        %v649 = vsel %vm476, %v381, 0
        %651 = vmatprep.subr.mxu0 0.0
        %652 = vmatpush1.msra.mxu0 %v640
        %653 = vmatprep.subr.mxu0 0.0
        %654 = vmatpush1.msra.mxu0 %v642
        %655 = vmatprep.subr.mxu0 0.0
        %656 = vmatpush1.msra.mxu0 0.0
        %657 = vmatprep.subr.mxu0 0.0
        %658 = vmatpush1.msra.mxu0 0.0
        %659 = vmatprep.subr.mxu0 0.0
        %660 = vmatpush1.msra.mxu0 0.0
        %661 = vmatprep.subr.mxu0 0.0
        %662 = vmatpush1.msra.mxu0 0.0
        %663 = vmatprep.subr.mxu0 0.0
        %664 = vmatpush1.msra.mxu0 0.0
        %665 = vmatprep.subr.mxu0 0.0
        %666 = vmatpush1.msra.mxu0 0.0
        %667 = vmatprep.subr.mxu0 0.0
        %668 = vmatpush1.msra.mxu0 0.0
        %669 = vmatprep.subr.mxu0 0.0
        %670 = vmatpush1.msra.mxu0 0.0
        %671 = vmatprep.subr.mxu0 0.0
        %672 = vmatpush1.msra.mxu0 0.0
        %673 = vmatprep.subr.mxu0 0.0
        %674 = vmatpush1.msra.mxu0 0.0
        %675 = vmatprep.subr.mxu0 0.0
        %676 = vmatpush1.msra.mxu0 0.0
        %677 = vmatprep.subr.mxu0 0.0
        %678 = vmatpush1.msra.mxu0 0.0
        %679 = vmatprep.subr.mxu0 0.0
        %680 = vmatpush1.msra.mxu0 0.0
        %681 = vmatprep.subr.mxu0 0.0
        %682 = vmatpush1.msra.mxu0 0.0
        %683 = vmatprep.subr.mxu0 0.0
        %684 = vmatpush1.msra.mxu0 0.0
        %685 = vmatprep.subr.mxu0 0.0
        %686 = vmatpush1.msra.mxu0 0.0
        %687 = vmatprep.subr.mxu0 0.0
        %688 = vmatpush1.msra.mxu0 0.0
        %689 = vmatprep.subr.mxu0 0.0
        %690 = vmatpush1.msra.mxu0 0.0
        %691 = vmatprep.subr.mxu0 0.0
        %692 = vmatpush1.msra.mxu0 0.0
        %693 = vmatprep.subr.mxu0 0.0
        %694 = vmatpush1.msra.mxu0 0.0
        %695 = vmatprep.subr.mxu0 0.0
        %696 = vmatpush1.msra.mxu0 0.0
        %697 = vmatprep.subr.mxu0 0.0
        %698 = vmatpush1.msra.mxu0 0.0
        %699 = vmatprep.subr.mxu0 0.0
        %700 = vmatpush1.msra.mxu0 0.0
        %701 = vmatprep.subr.mxu0 0.0
        %702 = vmatpush1.msra.mxu0 0.0
        %703 = vmatprep.subr.mxu0 0.0
        %704 = vmatpush1.msra.mxu0 0.0
        %705 = vmatprep.subr.mxu0 0.0
        %706 = vmatpush1.msra.mxu0 0.0
        %707 = vmatprep.subr.mxu0 0.0
        %708 = vmatpush1.msra.mxu0 0.0
        %709 = vmatprep.subr.mxu0 0.0
        %710 = vmatpush1.msra.mxu0 0.0
        %711 = vmatprep.subr.mxu0 0.0
        %712 = vmatpush1.msra.mxu0 0.0
        %713 = vmatprep.subr.mxu0 0.0
        %714 = vmatpush1.msra.mxu0 0.0
        %715 = vmatprep.mubr.f32.mxu0 0.0
        %716 = vmatmul.mubr.f32.gmra.mrb[0].mxu0 %v646
        %v717 = vpop.f32.mrb[0].mxu0
        %v718 = vadd.f32 0.0, %v717
        %v719 = vpop.f32.mrb[0].mxu0
        %720 = vmatprep.mubr.f32.mxu0 0.0
        %721 = vmatmul.mubr.f32.gmra.mrb[0].mxu0 %v649
        %v722 = vpop.f32.mrb[0].mxu0
        %v723 = vadd.f32 0.0, %v722
        %v724 = vpop.f32.mrb[0].mxu0
        %725 = vdwg.mxu0
        %v726 = vadd.f32 %v631, %v718
        %v727 = vadd.f32 %v636, %v723
        %v728 = vld [vmem:[#allocation8] sm:$0xff]
        %v729 = vld [vmem:[#allocation8 + $0x8] sm:$0xff]
        %v730 = vld [vmem:[#allocation8 + $0x10] sm:$0xff]
        %v731 = vld [vmem:[#allocation8 + $0x18] sm:$0xff]
        %732 = vmatprep.subr.mxu0 0.0
        %733 = vmatpush1.msra.mxu0 %v728
        %734 = vmatprep.subr.mxu0 0.0
        %735 = vmatpush1.msra.mxu0 %v729
        %736 = vmatprep.subr.mxu0 0.0
        %737 = vmatpush1.msra.mxu0 %v730
        %738 = vmatprep.subr.mxu0 0.0
        %739 = vmatpush1.msra.mxu0 %v731
        %740 = vmatprep.subr.mxu0 0.0
        %741 = vmatpush1.msra.mxu0 0.0
        %742 = vmatprep.subr.mxu0 0.0
        %743 = vmatpush1.msra.mxu0 0.0
        %744 = vmatprep.subr.mxu0 0.0
        %745 = vmatpush1.msra.mxu0 0.0
        %746 = vmatprep.subr.mxu0 0.0
        %747 = vmatpush1.msra.mxu0 0.0
        %748 = vmatprep.subr.mxu0 0.0
        %749 = vmatpush1.msra.mxu0 0.0
        %750 = vmatprep.subr.mxu0 0.0
        %751 = vmatpush1.msra.mxu0 0.0
        %752 = vmatprep.subr.mxu0 0.0
        %753 = vmatpush1.msra.mxu0 0.0
        %754 = vmatprep.subr.mxu0 0.0
        %755 = vmatpush1.msra.mxu0 0.0
        %756 = vmatprep.subr.mxu0 0.0
        %757 = vmatpush1.msra.mxu0 0.0
        %758 = vmatprep.subr.mxu0 0.0
        %759 = vmatpush1.msra.mxu0 0.0
        %760 = vmatprep.subr.mxu0 0.0
        %761 = vmatpush1.msra.mxu0 0.0
        %762 = vmatprep.subr.mxu0 0.0
        %763 = vmatpush1.msra.mxu0 0.0
        %764 = vmatprep.subr.mxu0 0.0
        %765 = vmatpush1.msra.mxu0 0.0
        %766 = vmatprep.subr.mxu0 0.0
        %767 = vmatpush1.msra.mxu0 0.0
        %768 = vmatprep.subr.mxu0 0.0
        %769 = vmatpush1.msra.mxu0 0.0
        %770 = vmatprep.subr.mxu0 0.0
        %771 = vmatpush1.msra.mxu0 0.0
        %772 = vmatprep.subr.mxu0 0.0
        %773 = vmatpush1.msra.mxu0 0.0
        %774 = vmatprep.subr.mxu0 0.0
        %775 = vmatpush1.msra.mxu0 0.0
        %776 = vmatprep.subr.mxu0 0.0
        %777 = vmatpush1.msra.mxu0 0.0
        %778 = vmatprep.subr.mxu0 0.0
        %779 = vmatpush1.msra.mxu0 0.0
        %780 = vmatprep.subr.mxu0 0.0
        %781 = vmatpush1.msra.mxu0 0.0
        %782 = vmatprep.subr.mxu0 0.0
        %783 = vmatpush1.msra.mxu0 0.0
        %784 = vmatprep.subr.mxu0 0.0
        %785 = vmatpush1.msra.mxu0 0.0
        %786 = vmatprep.subr.mxu0 0.0
        %787 = vmatpush1.msra.mxu0 0.0
        %788 = vmatprep.subr.mxu0 0.0
        %789 = vmatpush1.msra.mxu0 0.0
        %790 = vmatprep.subr.mxu0 0.0
        %791 = vmatpush1.msra.mxu0 0.0
        %792 = vmatprep.subr.mxu0 0.0
        %793 = vmatpush1.msra.mxu0 0.0
        %794 = vmatprep.subr.mxu0 0.0
        %795 = vmatpush1.msra.mxu0 0.0
        %796 = vmatprep.mubr.f32.mxu0 0.0
        %797 = vmatmul.mubr.f32.gmra.mrb[0].mxu0 %v388
        %v798 = vpop.f32.mrb[0].mxu0
        %v799 = vadd.f32 0.0, %v798
        %v800 = vpop.f32.mrb[0].mxu0
        %801 = vdwg.mxu0
        %v803 = vsel %vm386, %v799, 0
        %805 = vmatprep.subr.mxu0 0.0
        %806 = vmatpush1.xpose.msra.mxu0 %v391
        %807 = vmatprep.subr.mxu0 0.0
        %808 = vmatpush1.xpose.msra.mxu0 0.0
        %809 = vmatprep.subr.mxu0 0.0
        %810 = vmatpush1.xpose.msra.mxu0 0.0
        %811 = vmatprep.subr.mxu0 0.0
        %812 = vmatpush1.xpose.msra.mxu0 0.0
        %813 = vmatprep.subr.mxu0 0.0
        %814 = vmatpush1.xpose.msra.mxu0 0.0
        %815 = vmatprep.subr.mxu0 0.0
        %816 = vmatpush1.xpose.msra.mxu0 0.0
        %817 = vmatprep.subr.mxu0 0.0
        %818 = vmatpush1.xpose.msra.mxu0 0.0
        %819 = vmatprep.subr.mxu0 0.0
        %820 = vmatpush1.xpose.msra.mxu0 0.0
        %821 = vmatprep.subr.mxu0 0.0
        %822 = vmatpush1.xpose.msra.mxu0 0.0
        %823 = vmatprep.subr.mxu0 0.0
        %824 = vmatpush1.xpose.msra.mxu0 0.0
        %825 = vmatprep.subr.mxu0 0.0
        %826 = vmatpush1.xpose.msra.mxu0 0.0
        %827 = vmatprep.subr.mxu0 0.0
        %828 = vmatpush1.xpose.msra.mxu0 0.0
        %829 = vmatprep.subr.mxu0 0.0
        %830 = vmatpush1.xpose.msra.mxu0 0.0
        %831 = vmatprep.subr.mxu0 0.0
        %832 = vmatpush1.xpose.msra.mxu0 0.0
        %833 = vmatprep.subr.mxu0 0.0
        %834 = vmatpush1.xpose.msra.mxu0 0.0
        %835 = vmatprep.subr.mxu0 0.0
        %836 = vmatpush1.xpose.msra.mxu0 0.0
        %837 = vmatprep.subr.mxu0 0.0
        %838 = vmatpush1.xpose.msra.mxu0 0.0
        %839 = vmatprep.subr.mxu0 0.0
        %840 = vmatpush1.xpose.msra.mxu0 0.0
        %841 = vmatprep.subr.mxu0 0.0
        %842 = vmatpush1.xpose.msra.mxu0 0.0
        %843 = vmatprep.subr.mxu0 0.0
        %844 = vmatpush1.xpose.msra.mxu0 0.0
        %845 = vmatprep.subr.mxu0 0.0
        %846 = vmatpush1.xpose.msra.mxu0 0.0
        %847 = vmatprep.subr.mxu0 0.0
        %848 = vmatpush1.xpose.msra.mxu0 0.0
        %849 = vmatprep.subr.mxu0 0.0
        %850 = vmatpush1.xpose.msra.mxu0 0.0
        %851 = vmatprep.subr.mxu0 0.0
        %852 = vmatpush1.xpose.msra.mxu0 0.0
        %853 = vmatprep.subr.mxu0 0.0
        %854 = vmatpush1.xpose.msra.mxu0 0.0
        %855 = vmatprep.subr.mxu0 0.0
        %856 = vmatpush1.xpose.msra.mxu0 0.0
        %857 = vmatprep.subr.mxu0 0.0
        %858 = vmatpush1.xpose.msra.mxu0 0.0
        %859 = vmatprep.subr.mxu0 0.0
        %860 = vmatpush1.xpose.msra.mxu0 0.0
        %861 = vmatprep.subr.mxu0 0.0
        %862 = vmatpush1.xpose.msra.mxu0 0.0
        %863 = vmatprep.subr.mxu0 0.0
        %864 = vmatpush1.xpose.msra.mxu0 0.0
        %865 = vmatprep.subr.mxu0 0.0
        %866 = vmatpush1.xpose.msra.mxu0 0.0
        %867 = vmatprep.subr.mxu0 0.0
        %868 = vmatpush1.xpose.msra.mxu0 0.0
        %869 = vmatprep.mubr.f32.mxu0 0.0
        %870 = vmatmul.mubr.f32.gmra.mrb[0].mxu0 %v803
        %v871 = vpop.f32.mrb[0].mxu0
        %v872 = vadd.f32 0.0, %v871
        %v873 = vpop.f32.mrb[0].mxu0
        %874 = vdwg.mxu0
        %v875 = vtanh.pop %v872
        %v876 = vmul.f32 %v875, %v375
        %vm877 = vcmask 64512
        %v878 = vsel %vm877, %v876, -inf
        %879 = vmax.xlane.f32.xlu0 %v878
        %v880 = vpop.xlane.xlu0 %879
        %v881 = vsub.f32 %v876, %v880
        %v882 = vmul.f32 %v881, 1.442695
        %v883 = vpow.pop %v882
        %v884 = vsel %vm877, %v883, 0.0
        %885 = vadd.xlane.f32.xlu0 %v884
        %v886 = vpop.xlane.xlu0 %885
        %v887 = vrcp.pop %v886
        %v888 = vmul.f32 %v883, %v887
        %v889 = vmul.f32 %v888, %v375
        %v890 = vsel %vm877, %v889, 0.0
        %891 = vadd.xlane.f32.xlu0 %v890
        %v892 = vpop.xlane.xlu0 %891
        %v893 = vadd.f32 %v892, 1e-13
        %v894 = vrcp.pop %v893
        %v895 = vmul.f32 %v889, %v894
        %v896 = vrot.slane %v878, 4
        %v897 = vmax.f32 %v878, %v896
        %v898 = vrot.slane %v897, 2
        %v899 = vmax.f32 %v897, %v898
        %v900 = vrot.slane %v899, 1
        %v901 = vmax.f32 %v899, %v900
        %v902 = vsub.f32 %v876, %v901
        %v903 = vmul.f32 %v902, 1.442695
        %v904 = vpow.pop %v903
        %v905 = vsel %vm877, %v904, 0.0
        %v906 = vrot.slane %v905, 4
        %v907 = vadd.f32 %v905, %v906
        %v908 = vrot.slane %v907, 2
        %v909 = vadd.f32 %v907, %v908
        %v910 = vrot.slane %v909, 1
        %v911 = vadd.f32 %v909, %v910
        %v912 = vrcp.pop %v911
        %v913 = vmul.f32 %v904, %v912
        %v914 = vmul.f32 %v913, %v375
        %v915 = vsel %vm877, %v914, 0.0
        %v916 = vrot.slane %v915, 4
        %v917 = vadd.f32 %v915, %v916
        %v918 = vrot.slane %v917, 2
        %v919 = vadd.f32 %v917, %v918
        %v920 = vrot.slane %v919, 1
        %v921 = vadd.f32 %v919, %v920
        %v922 = vadd.f32 %v921, 1e-13
        %v923 = vrcp.pop %v922
        %v924 = vmul.f32 %v914, %v923
        %v926 = vsel %vm877, %v895, 0
        %928 = vmatprep.subr.mxu0 0.0
        %929 = vmatpush1.msra.mxu0 %v642
        %930 = vmatprep.subr.mxu0 0.0
        %931 = vmatpush1.msra.mxu0 0.0
        %932 = vmatprep.subr.mxu0 0.0
        %933 = vmatpush1.msra.mxu0 0.0
        %934 = vmatprep.subr.mxu0 0.0
        %935 = vmatpush1.msra.mxu0 0.0
        %936 = vmatprep.subr.mxu0 0.0
        %937 = vmatpush1.msra.mxu0 0.0
        %938 = vmatprep.subr.mxu0 0.0
        %939 = vmatpush1.msra.mxu0 0.0
        %940 = vmatprep.subr.mxu0 0.0
        %941 = vmatpush1.msra.mxu0 0.0
        %942 = vmatprep.subr.mxu0 0.0
        %943 = vmatpush1.msra.mxu0 0.0
        %944 = vmatprep.subr.mxu0 0.0
        %945 = vmatpush1.msra.mxu0 0.0
        %946 = vmatprep.subr.mxu0 0.0
        %947 = vmatpush1.msra.mxu0 0.0
        %948 = vmatprep.subr.mxu0 0.0
        %949 = vmatpush1.msra.mxu0 0.0
        %950 = vmatprep.subr.mxu0 0.0
        %951 = vmatpush1.msra.mxu0 0.0
        %952 = vmatprep.subr.mxu0 0.0
        %953 = vmatpush1.msra.mxu0 0.0
        %954 = vmatprep.subr.mxu0 0.0
        %955 = vmatpush1.msra.mxu0 0.0
        %956 = vmatprep.subr.mxu0 0.0
        %957 = vmatpush1.msra.mxu0 0.0
        %958 = vmatprep.subr.mxu0 0.0
        %959 = vmatpush1.msra.mxu0 0.0
        %960 = vmatprep.subr.mxu0 0.0
        %961 = vmatpush1.msra.mxu0 0.0
        %962 = vmatprep.subr.mxu0 0.0
        %963 = vmatpush1.msra.mxu0 0.0
        %964 = vmatprep.subr.mxu0 0.0
        %965 = vmatpush1.msra.mxu0 0.0
        %966 = vmatprep.subr.mxu0 0.0
        %967 = vmatpush1.msra.mxu0 0.0
        %968 = vmatprep.subr.mxu0 0.0
        %969 = vmatpush1.msra.mxu0 0.0
        %970 = vmatprep.subr.mxu0 0.0
        %971 = vmatpush1.msra.mxu0 0.0
        %972 = vmatprep.subr.mxu0 0.0
        %973 = vmatpush1.msra.mxu0 0.0
        %974 = vmatprep.subr.mxu0 0.0
        %975 = vmatpush1.msra.mxu0 0.0
        %976 = vmatprep.subr.mxu0 0.0
        %977 = vmatpush1.msra.mxu0 0.0
        %978 = vmatprep.subr.mxu0 0.0
        %979 = vmatpush1.msra.mxu0 0.0
        %980 = vmatprep.subr.mxu0 0.0
        %981 = vmatpush1.msra.mxu0 0.0
        %982 = vmatprep.subr.mxu0 0.0
        %983 = vmatpush1.msra.mxu0 0.0
        %984 = vmatprep.subr.mxu0 0.0
        %985 = vmatpush1.msra.mxu0 0.0
        %986 = vmatprep.subr.mxu0 0.0
        %987 = vmatpush1.msra.mxu0 0.0
        %988 = vmatprep.subr.mxu0 0.0
        %989 = vmatpush1.msra.mxu0 0.0
        %990 = vmatprep.subr.mxu0 0.0
        %991 = vmatpush1.msra.mxu0 0.0
        %992 = vmatprep.mubr.f32.mxu0 0.0
        %993 = vmatmul.mubr.f32.gmra.mrb[0].mxu0 %v926
        %v994 = vpop.f32.mrb[0].mxu0
        %v995 = vadd.f32 0.0, %v994
        %v996 = vpop.f32.mrb[0].mxu0
        %997 = vdwg.mxu0
        %998 = vxpose.xlu0.b32.start [1/16] %v924, 128
        %999 = vxpose.xlu0.b32.cont [2/16] 0.0, 128
        %1000 = vxpose.xlu0.b32.cont [3/16] 0.0, 128
        %1001 = vxpose.xlu0.b32.cont [4/16] 0.0, 128
        %1002 = vxpose.xlu0.b32.cont [5/16] 0.0, 128
        %1003 = vxpose.xlu0.b32.cont [6/16] 0.0, 128
        %1004 = vxpose.xlu0.b32.cont [7/16] 0.0, 128
        %1005 = vxpose.xlu0.b32.cont [8/16] 0.0, 128
        %1006 = vxpose.xlu0.b32.cont [9/16] 0.0, 128
        %1007 = vxpose.xlu0.b32.cont [10/16] 0.0, 128
        %1008 = vxpose.xlu0.b32.cont [11/16] 0.0, 128
        %1009 = vxpose.xlu0.b32.cont [12/16] 0.0, 128
        %1010 = vxpose.xlu0.b32.cont [13/16] 0.0, 128
        %1011 = vxpose.xlu0.b32.cont [14/16] 0.0, 128
        %1012 = vxpose.xlu0.b32.cont [15/16] 0.0, 128
        %1013 = vxpose.xlu0.b32.end [16/16] 0.0, 128
        %v1014 = vpop.trf.xlu0
        %v1015 = vpop.trf.xlu0
        %v1016 = vpop.trf.xlu0
        %v1017 = vpop.trf.xlu0
        %v1018 = vpop.trf.xlu0
        %v1019 = vpop.trf.xlu0
        %v1020 = vpop.trf.xlu0
        %v1021 = vpop.trf.xlu0
        %v1022 = vpop.trf.xlu0
        %v1023 = vpop.trf.xlu0
        %v1024 = vpop.trf.xlu0
        %v1025 = vpop.trf.xlu0
        %v1026 = vpop.trf.xlu0
        %v1027 = vpop.trf.xlu0
        %v1028 = vpop.trf.xlu0
        %v1029 = vpop.trf.xlu0
        %v1031 = vsel %vm877, %v1014, 0
        %1033 = vmatprep.subr.mxu0 0.0
        %1034 = vmatpush1.msra.mxu0 %v640
        %1035 = vmatprep.subr.mxu0 0.0
        %1036 = vmatpush1.msra.mxu0 0.0
        %1037 = vmatprep.subr.mxu0 0.0
        %1038 = vmatpush1.msra.mxu0 0.0
        %1039 = vmatprep.subr.mxu0 0.0
        %1040 = vmatpush1.msra.mxu0 0.0
        %1041 = vmatprep.subr.mxu0 0.0
        %1042 = vmatpush1.msra.mxu0 0.0
        %1043 = vmatprep.subr.mxu0 0.0
        %1044 = vmatpush1.msra.mxu0 0.0
        %1045 = vmatprep.subr.mxu0 0.0
        %1046 = vmatpush1.msra.mxu0 0.0
        %1047 = vmatprep.subr.mxu0 0.0
        %1048 = vmatpush1.msra.mxu0 0.0
        %1049 = vmatprep.subr.mxu0 0.0
        %1050 = vmatpush1.msra.mxu0 0.0
        %1051 = vmatprep.subr.mxu0 0.0
        %1052 = vmatpush1.msra.mxu0 0.0
        %1053 = vmatprep.subr.mxu0 0.0
        %1054 = vmatpush1.msra.mxu0 0.0
        %1055 = vmatprep.subr.mxu0 0.0
        %1056 = vmatpush1.msra.mxu0 0.0
        %1057 = vmatprep.subr.mxu0 0.0
        %1058 = vmatpush1.msra.mxu0 0.0
        %1059 = vmatprep.subr.mxu0 0.0
        %1060 = vmatpush1.msra.mxu0 0.0
        %1061 = vmatprep.subr.mxu0 0.0
        %1062 = vmatpush1.msra.mxu0 0.0
        %1063 = vmatprep.subr.mxu0 0.0
        %1064 = vmatpush1.msra.mxu0 0.0
        %1065 = vmatprep.subr.mxu0 0.0
        %1066 = vmatpush1.msra.mxu0 0.0
        %1067 = vmatprep.subr.mxu0 0.0
        %1068 = vmatpush1.msra.mxu0 0.0
        %1069 = vmatprep.subr.mxu0 0.0
        %1070 = vmatpush1.msra.mxu0 0.0
        %1071 = vmatprep.subr.mxu0 0.0
        %1072 = vmatpush1.msra.mxu0 0.0
        %1073 = vmatprep.subr.mxu0 0.0
        %1074 = vmatpush1.msra.mxu0 0.0
        %1075 = vmatprep.subr.mxu0 0.0
        %1076 = vmatpush1.msra.mxu0 0.0
        %1077 = vmatprep.subr.mxu0 0.0
        %1078 = vmatpush1.msra.mxu0 0.0
        %1079 = vmatprep.subr.mxu0 0.0
        %1080 = vmatpush1.msra.mxu0 0.0
        %1081 = vmatprep.subr.mxu0 0.0
        %1082 = vmatpush1.msra.mxu0 0.0
        %1083 = vmatprep.subr.mxu0 0.0
        %1084 = vmatpush1.msra.mxu0 0.0
        %1085 = vmatprep.subr.mxu0 0.0
        %1086 = vmatpush1.msra.mxu0 0.0
        %1087 = vmatprep.subr.mxu0 0.0
        %1088 = vmatpush1.msra.mxu0 0.0
        %1089 = vmatprep.subr.mxu0 0.0
        %1090 = vmatpush1.msra.mxu0 0.0
        %1091 = vmatprep.subr.mxu0 0.0
        %1092 = vmatpush1.msra.mxu0 0.0
        %1093 = vmatprep.subr.mxu0 0.0
        %1094 = vmatpush1.msra.mxu0 0.0
        %1095 = vmatprep.subr.mxu0 0.0
        %1096 = vmatpush1.msra.mxu0 0.0
        %1097 = vmatprep.mubr.f32.mxu0 0.0
        %1098 = vmatmul.mubr.f32.gmra.mrb[0].mxu0 %v1031
        %v1099 = vpop.f32.mrb[0].mxu0
        %v1100 = vadd.f32 0.0, %v1099
        %v1101 = vpop.f32.mrb[0].mxu0
        %1102 = vdwg.mxu0
        %v1103 = vadd.f32 %v726, %v995
        %v1104 = vadd.f32 %v727, %v1100
        %v1105 = vld [vmem:[%s5] sm:$0x1]
        %v1107 = vlaneseq
        %v1108 = vshrl.u32 %v1107, 7
        %v1109 = vsub.s32 0, %v1108
        %v1110 = vrot.slane %v1105, %v1109
        %v1112 = vadd.f32 %v1103, %v1110
        %v1113 = vadd.f32 %v1104, %v1110
        %v1114 = vmax.f32 %v1112, 0.0
        %v1115 = vmax.f32 %v1113, 0.0
        %s1116 = scalar_lea.vmem [#allocation10], 32
        %v1117 = vld [vmem:[%s1116] sm:$0xff]
        %v1118 = vld [vmem:[%s1116 + $0x8] sm:$0xff]
        %v1119 = vld [vmem:[%s1116 + $0x10] sm:$0xff]
        %v1120 = vld [vmem:[%s1116 + $0x18] sm:$0xff]
        %v1122 = vsel %vm386, %v1114, 0
        %v1125 = vsel %vm386, %v1115, 0
        %1127 = vmatprep.subr.mxu0 0.0
        %1128 = vmatpush1.msra.mxu0 %v1117
        %1129 = vmatprep.subr.mxu0 0.0
        %1130 = vmatpush1.msra.mxu0 %v1118
        %1131 = vmatprep.subr.mxu0 0.0
        %1132 = vmatpush1.msra.mxu0 %v1119
        %1133 = vmatprep.subr.mxu0 0.0
        %1134 = vmatpush1.msra.mxu0 %v1120
        %1135 = vmatprep.subr.mxu0 0.0
        %1136 = vmatpush1.msra.mxu0 0.0
        %1137 = vmatprep.subr.mxu0 0.0
        %1138 = vmatpush1.msra.mxu0 0.0
        %1139 = vmatprep.subr.mxu0 0.0
        %1140 = vmatpush1.msra.mxu0 0.0
        %1141 = vmatprep.subr.mxu0 0.0
        %1142 = vmatpush1.msra.mxu0 0.0
        %1143 = vmatprep.subr.mxu0 0.0
        %1144 = vmatpush1.msra.mxu0 0.0
        %1145 = vmatprep.subr.mxu0 0.0
        %1146 = vmatpush1.msra.mxu0 0.0
        %1147 = vmatprep.subr.mxu0 0.0
        %1148 = vmatpush1.msra.mxu0 0.0
        %1149 = vmatprep.subr.mxu0 0.0
        %1150 = vmatpush1.msra.mxu0 0.0
        %1151 = vmatprep.subr.mxu0 0.0
        %1152 = vmatpush1.msra.mxu0 0.0
        %1153 = vmatprep.subr.mxu0 0.0
        %1154 = vmatpush1.msra.mxu0 0.0
        %1155 = vmatprep.subr.mxu0 0.0
        %1156 = vmatpush1.msra.mxu0 0.0
        %1157 = vmatprep.subr.mxu0 0.0
        %1158 = vmatpush1.msra.mxu0 0.0
        %1159 = vmatprep.subr.mxu0 0.0
        %1160 = vmatpush1.msra.mxu0 0.0
        %1161 = vmatprep.subr.mxu0 0.0
        %1162 = vmatpush1.msra.mxu0 0.0
        %1163 = vmatprep.subr.mxu0 0.0
        %1164 = vmatpush1.msra.mxu0 0.0
        %1165 = vmatprep.subr.mxu0 0.0
        %1166 = vmatpush1.msra.mxu0 0.0
        %1167 = vmatprep.subr.mxu0 0.0
        %1168 = vmatpush1.msra.mxu0 0.0
        %1169 = vmatprep.subr.mxu0 0.0
        %1170 = vmatpush1.msra.mxu0 0.0
        %1171 = vmatprep.subr.mxu0 0.0
        %1172 = vmatpush1.msra.mxu0 0.0
        %1173 = vmatprep.subr.mxu0 0.0
        %1174 = vmatpush1.msra.mxu0 0.0
        %1175 = vmatprep.subr.mxu0 0.0
        %1176 = vmatpush1.msra.mxu0 0.0
        %1177 = vmatprep.subr.mxu0 0.0
        %1178 = vmatpush1.msra.mxu0 0.0
        %1179 = vmatprep.subr.mxu0 0.0
        %1180 = vmatpush1.msra.mxu0 0.0
        %1181 = vmatprep.subr.mxu0 0.0
        %1182 = vmatpush1.msra.mxu0 0.0
        %1183 = vmatprep.subr.mxu0 0.0
        %1184 = vmatpush1.msra.mxu0 0.0
        %1185 = vmatprep.subr.mxu0 0.0
        %1186 = vmatpush1.msra.mxu0 0.0
        %1187 = vmatprep.subr.mxu0 0.0
        %1188 = vmatpush1.msra.mxu0 0.0
        %1189 = vmatprep.subr.mxu0 0.0
        %1190 = vmatpush1.msra.mxu0 0.0
        %1191 = vmatprep.mubr.f32.mxu0 0.0
        %1192 = vmatmul.mubr.f32.gmra.mrb[0].mxu0 %v1122
        %v1193 = vpop.f32.mrb[0].mxu0
        %v1194 = vadd.f32 0.0, %v1193
        %v1195 = vpop.f32.mrb[0].mxu0
        %1196 = vmatprep.mubr.f32.mxu0 0.0
        %1197 = vmatmul.mubr.f32.gmra.mrb[0].mxu0 %v1125
        %v1198 = vpop.f32.mrb[0].mxu0
        %v1199 = vadd.f32 0.0, %v1198
        %v1200 = vpop.f32.mrb[0].mxu0
        %1201 = vdwg.mxu0
        %1204 = vrot.lane.b32.xlu0 %v1194, 96
        %v1205 = vpop.permute.xlu0 %1204
        %1206 = vrot.lane.b32.xlu0 %v1199, 96
        %v1207 = vpop.permute.xlu0 %1206
        %1210 = vmatprep.subr.mxu0 0.0
        %1211 = vmatpush1.msra.mxu0 %v1205
        %1212 = vmatprep.subr.mxu0 0.0
        %1213 = vmatpush1.msra.mxu0 %v1207
        %1214 = vmatprep.subr.mxu0 0.0
        %1215 = vmatpush1.msra.mxu0 0.0
        %1216 = vmatprep.subr.mxu0 0.0
        %1217 = vmatpush1.msra.mxu0 0.0
        %1218 = vmatprep.subr.mxu0 0.0
        %1219 = vmatpush1.msra.mxu0 0.0
        %1220 = vmatprep.subr.mxu0 0.0
        %1221 = vmatpush1.msra.mxu0 0.0
        %1222 = vmatprep.subr.mxu0 0.0
        %1223 = vmatpush1.msra.mxu0 0.0
        %1224 = vmatprep.subr.mxu0 0.0
        %1225 = vmatpush1.msra.mxu0 0.0
        %1226 = vmatprep.subr.mxu0 0.0
        %1227 = vmatpush1.msra.mxu0 0.0
        %1228 = vmatprep.subr.mxu0 0.0
        %1229 = vmatpush1.msra.mxu0 0.0
        %1230 = vmatprep.subr.mxu0 0.0
        %1231 = vmatpush1.msra.mxu0 0.0
        %1232 = vmatprep.subr.mxu0 0.0
        %1233 = vmatpush1.msra.mxu0 0.0
        %1234 = vmatprep.subr.mxu0 0.0
        %1235 = vmatpush1.msra.mxu0 0.0
        %1236 = vmatprep.subr.mxu0 0.0
        %1237 = vmatpush1.msra.mxu0 0.0
        %1238 = vmatprep.subr.mxu0 0.0
        %1239 = vmatpush1.msra.mxu0 0.0
        %1240 = vmatprep.subr.mxu0 0.0
        %1241 = vmatpush1.msra.mxu0 0.0
        %1242 = vmatprep.subr.mxu0 0.0
        %1243 = vmatpush1.msra.mxu0 0.0
        %1244 = vmatprep.subr.mxu0 0.0
        %1245 = vmatpush1.msra.mxu0 0.0
        %1246 = vmatprep.subr.mxu0 0.0
        %1247 = vmatpush1.msra.mxu0 0.0
        %1248 = vmatprep.subr.mxu0 0.0
        %1249 = vmatpush1.msra.mxu0 0.0
        %1250 = vmatprep.subr.mxu0 0.0
        %1251 = vmatpush1.msra.mxu0 0.0
        %1252 = vmatprep.subr.mxu0 0.0
        %1253 = vmatpush1.msra.mxu0 0.0
        %1254 = vmatprep.subr.mxu0 0.0
        %1255 = vmatpush1.msra.mxu0 0.0
        %1256 = vmatprep.subr.mxu0 0.0
        %1257 = vmatpush1.msra.mxu0 0.0
        %1258 = vmatprep.subr.mxu0 0.0
        %1259 = vmatpush1.msra.mxu0 0.0
        %1260 = vmatprep.subr.mxu0 0.0
        %1261 = vmatpush1.msra.mxu0 0.0
        %1262 = vmatprep.subr.mxu0 0.0
        %1263 = vmatpush1.msra.mxu0 0.0
        %1264 = vmatprep.subr.mxu0 0.0
        %1265 = vmatpush1.msra.mxu0 0.0
        %1266 = vmatprep.subr.mxu0 0.0
        %1267 = vmatpush1.msra.mxu0 0.0
        %1268 = vmatprep.subr.mxu0 0.0
        %1269 = vmatpush1.msra.mxu0 0.0
        %1270 = vmatprep.subr.mxu0 0.0
        %1271 = vmatpush1.msra.mxu0 0.0
        %1272 = vmatprep.subr.mxu0 0.0
        %1273 = vmatpush1.msra.mxu0 0.0
        %1274 = vmatprep.mubr.f32.mxu0 0.0
        %1275 = vmatmul.mubr.f32.gmra.mrb[0].mxu0 %v478
        %v1276 = vpop.f32.mrb[0].mxu0
        %v1277 = vadd.f32 0.0, %v1276
        %v1278 = vpop.f32.mrb[0].mxu0
        %1279 = vmatprep.mubr.f32.mxu0 0.0
        %1280 = vmatmul.mubr.f32.gmra.mrb[0].mxu0 %v481
        %v1281 = vpop.f32.mrb[0].mxu0
        %v1282 = vadd.f32 0.0, %v1281
        %v1283 = vpop.f32.mrb[0].mxu0
        %1284 = vdwg.mxu0
        %1285 = vmatprep.subr.mxu0 0.0
        %1286 = vmatpush1.msra.mxu0 %v1194
        %1287 = vmatprep.subr.mxu0 0.0
        %1288 = vmatpush1.msra.mxu0 %v1199
        %1289 = vmatprep.subr.mxu0 0.0
        %1290 = vmatpush1.msra.mxu0 0.0
        %1291 = vmatprep.subr.mxu0 0.0
        %1292 = vmatpush1.msra.mxu0 0.0
        %1293 = vmatprep.subr.mxu0 0.0
        %1294 = vmatpush1.msra.mxu0 0.0
        %1295 = vmatprep.subr.mxu0 0.0
        %1296 = vmatpush1.msra.mxu0 0.0
        %1297 = vmatprep.subr.mxu0 0.0
        %1298 = vmatpush1.msra.mxu0 0.0
        %1299 = vmatprep.subr.mxu0 0.0
        %1300 = vmatpush1.msra.mxu0 0.0
        %1301 = vmatprep.subr.mxu0 0.0
        %1302 = vmatpush1.msra.mxu0 0.0
        %1303 = vmatprep.subr.mxu0 0.0
        %1304 = vmatpush1.msra.mxu0 0.0
        %1305 = vmatprep.subr.mxu0 0.0
        %1306 = vmatpush1.msra.mxu0 0.0
        %1307 = vmatprep.subr.mxu0 0.0
        %1308 = vmatpush1.msra.mxu0 0.0
        %1309 = vmatprep.subr.mxu0 0.0
        %1310 = vmatpush1.msra.mxu0 0.0
        %1311 = vmatprep.subr.mxu0 0.0
        %1312 = vmatpush1.msra.mxu0 0.0
        %1313 = vmatprep.subr.mxu0 0.0
        %1314 = vmatpush1.msra.mxu0 0.0
        %1315 = vmatprep.subr.mxu0 0.0
        %1316 = vmatpush1.msra.mxu0 0.0
        %1317 = vmatprep.subr.mxu0 0.0
        %1318 = vmatpush1.msra.mxu0 0.0
        %1319 = vmatprep.subr.mxu0 0.0
        %1320 = vmatpush1.msra.mxu0 0.0
        %1321 = vmatprep.subr.mxu0 0.0
        %1322 = vmatpush1.msra.mxu0 0.0
        %1323 = vmatprep.subr.mxu0 0.0
        %1324 = vmatpush1.msra.mxu0 0.0
        %1325 = vmatprep.subr.mxu0 0.0
        %1326 = vmatpush1.msra.mxu0 0.0
        %1327 = vmatprep.subr.mxu0 0.0
        %1328 = vmatpush1.msra.mxu0 0.0
        %1329 = vmatprep.subr.mxu0 0.0
        %1330 = vmatpush1.msra.mxu0 0.0
        %1331 = vmatprep.subr.mxu0 0.0
        %1332 = vmatpush1.msra.mxu0 0.0
        %1333 = vmatprep.subr.mxu0 0.0
        %1334 = vmatpush1.msra.mxu0 0.0
        %1335 = vmatprep.subr.mxu0 0.0
        %1336 = vmatpush1.msra.mxu0 0.0
        %1337 = vmatprep.subr.mxu0 0.0
        %1338 = vmatpush1.msra.mxu0 0.0
        %1339 = vmatprep.subr.mxu0 0.0
        %1340 = vmatpush1.msra.mxu0 0.0
        %1341 = vmatprep.subr.mxu0 0.0
        %1342 = vmatpush1.msra.mxu0 0.0
        %1343 = vmatprep.subr.mxu0 0.0
        %1344 = vmatpush1.msra.mxu0 0.0
        %1345 = vmatprep.subr.mxu0 0.0
        %1346 = vmatpush1.msra.mxu0 0.0
        %1347 = vmatprep.subr.mxu0 0.0
        %1348 = vmatpush1.msra.mxu0 0.0
        %1349 = vmatprep.mubr.f32.mxu0 0.0
        %1350 = vmatmul.mubr.f32.gmra.mrb[0].mxu0 %v559
        %v1351 = vpop.f32.mrb[0].mxu0
        %v1352 = vadd.f32 %v1277, %v1351
        %v1353 = vpop.f32.mrb[0].mxu0
        %1354 = vmatprep.mubr.f32.mxu0 0.0
        %1355 = vmatmul.mubr.f32.gmra.mrb[0].mxu0 %v562
        %v1356 = vpop.f32.mrb[0].mxu0
        %v1357 = vadd.f32 %v1282, %v1356
        %v1358 = vpop.f32.mrb[0].mxu0
        %1359 = vdwg.mxu0
        %1360 = vrot.lane.b32.xlu0 %v1194, 64
        %v1361 = vpop.permute.xlu0 %1360
        %1362 = vrot.lane.b32.xlu0 %v1199, 64
        %v1363 = vpop.permute.xlu0 %1362
        %1366 = vmatprep.subr.mxu0 0.0
        %1367 = vmatpush1.msra.mxu0 %v1361
        %1368 = vmatprep.subr.mxu0 0.0
        %1369 = vmatpush1.msra.mxu0 %v1363
        %1370 = vmatprep.subr.mxu0 0.0
        %1371 = vmatpush1.msra.mxu0 0.0
        %1372 = vmatprep.subr.mxu0 0.0
        %1373 = vmatpush1.msra.mxu0 0.0
        %1374 = vmatprep.subr.mxu0 0.0
        %1375 = vmatpush1.msra.mxu0 0.0
        %1376 = vmatprep.subr.mxu0 0.0
        %1377 = vmatpush1.msra.mxu0 0.0
        %1378 = vmatprep.subr.mxu0 0.0
        %1379 = vmatpush1.msra.mxu0 0.0
        %1380 = vmatprep.subr.mxu0 0.0
        %1381 = vmatpush1.msra.mxu0 0.0
        %1382 = vmatprep.subr.mxu0 0.0
        %1383 = vmatpush1.msra.mxu0 0.0
        %1384 = vmatprep.subr.mxu0 0.0
        %1385 = vmatpush1.msra.mxu0 0.0
        %1386 = vmatprep.subr.mxu0 0.0
        %1387 = vmatpush1.msra.mxu0 0.0
        %1388 = vmatprep.subr.mxu0 0.0
        %1389 = vmatpush1.msra.mxu0 0.0
        %1390 = vmatprep.subr.mxu0 0.0
        %1391 = vmatpush1.msra.mxu0 0.0
        %1392 = vmatprep.subr.mxu0 0.0
        %1393 = vmatpush1.msra.mxu0 0.0
        %1394 = vmatprep.subr.mxu0 0.0
        %1395 = vmatpush1.msra.mxu0 0.0
        %1396 = vmatprep.subr.mxu0 0.0
        %1397 = vmatpush1.msra.mxu0 0.0
        %1398 = vmatprep.subr.mxu0 0.0
        %1399 = vmatpush1.msra.mxu0 0.0
        %1400 = vmatprep.subr.mxu0 0.0
        %1401 = vmatpush1.msra.mxu0 0.0
        %1402 = vmatprep.subr.mxu0 0.0
        %1403 = vmatpush1.msra.mxu0 0.0
        %1404 = vmatprep.subr.mxu0 0.0
        %1405 = vmatpush1.msra.mxu0 0.0
        %1406 = vmatprep.subr.mxu0 0.0
        %1407 = vmatpush1.msra.mxu0 0.0
        %1408 = vmatprep.subr.mxu0 0.0
        %1409 = vmatpush1.msra.mxu0 0.0
        %1410 = vmatprep.subr.mxu0 0.0
        %1411 = vmatpush1.msra.mxu0 0.0
        %1412 = vmatprep.subr.mxu0 0.0
        %1413 = vmatpush1.msra.mxu0 0.0
        %1414 = vmatprep.subr.mxu0 0.0
        %1415 = vmatpush1.msra.mxu0 0.0
        %1416 = vmatprep.subr.mxu0 0.0
        %1417 = vmatpush1.msra.mxu0 0.0
        %1418 = vmatprep.subr.mxu0 0.0
        %1419 = vmatpush1.msra.mxu0 0.0
        %1420 = vmatprep.subr.mxu0 0.0
        %1421 = vmatpush1.msra.mxu0 0.0
        %1422 = vmatprep.subr.mxu0 0.0
        %1423 = vmatpush1.msra.mxu0 0.0
        %1424 = vmatprep.subr.mxu0 0.0
        %1425 = vmatpush1.msra.mxu0 0.0
        %1426 = vmatprep.subr.mxu0 0.0
        %1427 = vmatpush1.msra.mxu0 0.0
        %1428 = vmatprep.subr.mxu0 0.0
        %1429 = vmatpush1.msra.mxu0 0.0
        %1430 = vmatprep.mubr.f32.mxu0 0.0
        %1431 = vmatmul.mubr.f32.gmra.mrb[0].mxu0 %v646
        %v1432 = vpop.f32.mrb[0].mxu0
        %v1433 = vadd.f32 0.0, %v1432
        %v1434 = vpop.f32.mrb[0].mxu0
        %1435 = vmatprep.mubr.f32.mxu0 0.0
        %1436 = vmatmul.mubr.f32.gmra.mrb[0].mxu0 %v649
        %v1437 = vpop.f32.mrb[0].mxu0
        %v1438 = vadd.f32 0.0, %v1437
        %v1439 = vpop.f32.mrb[0].mxu0
        %1440 = vdwg.mxu0
        %v1441 = vadd.f32 %v1352, %v1433
        %v1442 = vadd.f32 %v1357, %v1438
        %s1443 = scalar_lea.vmem [#allocation8], 32
        %v1444 = vld [vmem:[%s1443] sm:$0xff]
        %v1445 = vld [vmem:[%s1443 + $0x8] sm:$0xff]
        %v1446 = vld [vmem:[%s1443 + $0x10] sm:$0xff]
        %v1447 = vld [vmem:[%s1443 + $0x18] sm:$0xff]
        %1448 = vmatprep.subr.mxu0 0.0
        %1449 = vmatpush1.msra.mxu0 %v1444
        %1450 = vmatprep.subr.mxu0 0.0
        %1451 = vmatpush1.msra.mxu0 %v1445
        %1452 = vmatprep.subr.mxu0 0.0
        %1453 = vmatpush1.msra.mxu0 %v1446
        %1454 = vmatprep.subr.mxu0 0.0
        %1455 = vmatpush1.msra.mxu0 %v1447
        %1456 = vmatprep.subr.mxu0 0.0
        %1457 = vmatpush1.msra.mxu0 0.0
        %1458 = vmatprep.subr.mxu0 0.0
        %1459 = vmatpush1.msra.mxu0 0.0
        %1460 = vmatprep.subr.mxu0 0.0
        %1461 = vmatpush1.msra.mxu0 0.0
        %1462 = vmatprep.subr.mxu0 0.0
        %1463 = vmatpush1.msra.mxu0 0.0
        %1464 = vmatprep.subr.mxu0 0.0
        %1465 = vmatpush1.msra.mxu0 0.0
        %1466 = vmatprep.subr.mxu0 0.0
        %1467 = vmatpush1.msra.mxu0 0.0
        %1468 = vmatprep.subr.mxu0 0.0
        %1469 = vmatpush1.msra.mxu0 0.0
        %1470 = vmatprep.subr.mxu0 0.0
        %1471 = vmatpush1.msra.mxu0 0.0
        %1472 = vmatprep.subr.mxu0 0.0
        %1473 = vmatpush1.msra.mxu0 0.0
        %1474 = vmatprep.subr.mxu0 0.0
        %1475 = vmatpush1.msra.mxu0 0.0
        %1476 = vmatprep.subr.mxu0 0.0
        %1477 = vmatpush1.msra.mxu0 0.0
        %1478 = vmatprep.subr.mxu0 0.0
        %1479 = vmatpush1.msra.mxu0 0.0
        %1480 = vmatprep.subr.mxu0 0.0
        %1481 = vmatpush1.msra.mxu0 0.0
        %1482 = vmatprep.subr.mxu0 0.0
        %1483 = vmatpush1.msra.mxu0 0.0
        %1484 = vmatprep.subr.mxu0 0.0
        %1485 = vmatpush1.msra.mxu0 0.0
        %1486 = vmatprep.subr.mxu0 0.0
        %1487 = vmatpush1.msra.mxu0 0.0
        %1488 = vmatprep.subr.mxu0 0.0
        %1489 = vmatpush1.msra.mxu0 0.0
        %1490 = vmatprep.subr.mxu0 0.0
        %1491 = vmatpush1.msra.mxu0 0.0
        %1492 = vmatprep.subr.mxu0 0.0
        %1493 = vmatpush1.msra.mxu0 0.0
        %1494 = vmatprep.subr.mxu0 0.0
        %1495 = vmatpush1.msra.mxu0 0.0
        %1496 = vmatprep.subr.mxu0 0.0
        %1497 = vmatpush1.msra.mxu0 0.0
        %1498 = vmatprep.subr.mxu0 0.0
        %1499 = vmatpush1.msra.mxu0 0.0
        %1500 = vmatprep.subr.mxu0 0.0
        %1501 = vmatpush1.msra.mxu0 0.0
        %1502 = vmatprep.subr.mxu0 0.0
        %1503 = vmatpush1.msra.mxu0 0.0
        %1504 = vmatprep.subr.mxu0 0.0
        %1505 = vmatpush1.msra.mxu0 0.0
        %1506 = vmatprep.subr.mxu0 0.0
        %1507 = vmatpush1.msra.mxu0 0.0
        %1508 = vmatprep.subr.mxu0 0.0
        %1509 = vmatpush1.msra.mxu0 0.0
        %1510 = vmatprep.subr.mxu0 0.0
        %1511 = vmatpush1.msra.mxu0 0.0
        %1512 = vmatprep.mubr.f32.mxu0 0.0
        %1513 = vmatmul.mubr.f32.gmra.mrb[0].mxu0 %v1122
        %v1514 = vpop.f32.mrb[0].mxu0
        %v1515 = vadd.f32 0.0, %v1514
        %v1516 = vpop.f32.mrb[0].mxu0
        %1517 = vdwg.mxu0
        %v1519 = vsel %vm386, %v1515, 0
        %1521 = vmatprep.subr.mxu0 0.0
        %1522 = vmatpush1.xpose.msra.mxu0 %v1125
        %1523 = vmatprep.subr.mxu0 0.0
        %1524 = vmatpush1.xpose.msra.mxu0 0.0
        %1525 = vmatprep.subr.mxu0 0.0
        %1526 = vmatpush1.xpose.msra.mxu0 0.0
        %1527 = vmatprep.subr.mxu0 0.0
        %1528 = vmatpush1.xpose.msra.mxu0 0.0
        %1529 = vmatprep.subr.mxu0 0.0
        %1530 = vmatpush1.xpose.msra.mxu0 0.0
        %1531 = vmatprep.subr.mxu0 0.0
        %1532 = vmatpush1.xpose.msra.mxu0 0.0
        %1533 = vmatprep.subr.mxu0 0.0
        %1534 = vmatpush1.xpose.msra.mxu0 0.0
        %1535 = vmatprep.subr.mxu0 0.0
        %1536 = vmatpush1.xpose.msra.mxu0 0.0
        %1537 = vmatprep.subr.mxu0 0.0
        %1538 = vmatpush1.xpose.msra.mxu0 0.0
        %1539 = vmatprep.subr.mxu0 0.0
        %1540 = vmatpush1.xpose.msra.mxu0 0.0
        %1541 = vmatprep.subr.mxu0 0.0
        %1542 = vmatpush1.xpose.msra.mxu0 0.0
        %1543 = vmatprep.subr.mxu0 0.0
        %1544 = vmatpush1.xpose.msra.mxu0 0.0
        %1545 = vmatprep.subr.mxu0 0.0
        %1546 = vmatpush1.xpose.msra.mxu0 0.0
        %1547 = vmatprep.subr.mxu0 0.0
        %1548 = vmatpush1.xpose.msra.mxu0 0.0
        %1549 = vmatprep.subr.mxu0 0.0
        %1550 = vmatpush1.xpose.msra.mxu0 0.0
        %1551 = vmatprep.subr.mxu0 0.0
        %1552 = vmatpush1.xpose.msra.mxu0 0.0
        %1553 = vmatprep.subr.mxu0 0.0
        %1554 = vmatpush1.xpose.msra.mxu0 0.0
        %1555 = vmatprep.subr.mxu0 0.0
        %1556 = vmatpush1.xpose.msra.mxu0 0.0
        %1557 = vmatprep.subr.mxu0 0.0
        %1558 = vmatpush1.xpose.msra.mxu0 0.0
        %1559 = vmatprep.subr.mxu0 0.0
        %1560 = vmatpush1.xpose.msra.mxu0 0.0
        %1561 = vmatprep.subr.mxu0 0.0
        %1562 = vmatpush1.xpose.msra.mxu0 0.0
        %1563 = vmatprep.subr.mxu0 0.0
        %1564 = vmatpush1.xpose.msra.mxu0 0.0
        %1565 = vmatprep.subr.mxu0 0.0
        %1566 = vmatpush1.xpose.msra.mxu0 0.0
        %1567 = vmatprep.subr.mxu0 0.0
        %1568 = vmatpush1.xpose.msra.mxu0 0.0
        %1569 = vmatprep.subr.mxu0 0.0
        %1570 = vmatpush1.xpose.msra.mxu0 0.0
        %1571 = vmatprep.subr.mxu0 0.0
        %1572 = vmatpush1.xpose.msra.mxu0 0.0
        %1573 = vmatprep.subr.mxu0 0.0
        %1574 = vmatpush1.xpose.msra.mxu0 0.0
        %1575 = vmatprep.subr.mxu0 0.0
        %1576 = vmatpush1.xpose.msra.mxu0 0.0
        %1577 = vmatprep.subr.mxu0 0.0
        %1578 = vmatpush1.xpose.msra.mxu0 0.0
        %1579 = vmatprep.subr.mxu0 0.0
        %1580 = vmatpush1.xpose.msra.mxu0 0.0
        %1581 = vmatprep.subr.mxu0 0.0
        %1582 = vmatpush1.xpose.msra.mxu0 0.0
        %1583 = vmatprep.subr.mxu0 0.0
        %1584 = vmatpush1.xpose.msra.mxu0 0.0
        %1585 = vmatprep.mubr.f32.mxu0 0.0
        %1586 = vmatmul.mubr.f32.gmra.mrb[0].mxu0 %v1519
        %v1587 = vpop.f32.mrb[0].mxu0
        %v1588 = vadd.f32 0.0, %v1587
        %v1589 = vpop.f32.mrb[0].mxu0
        %1590 = vdwg.mxu0
        %v1591 = vtanh.pop %v1588
        %v1592 = vmul.f32 %v1591, %v375
        %v1593 = vsel %vm877, %v1592, -inf
        %1594 = vmax.xlane.f32.xlu0 %v1593
        %v1595 = vpop.xlane.xlu0 %1594
        %v1596 = vsub.f32 %v1592, %v1595
        %v1597 = vmul.f32 %v1596, 1.442695
        %v1598 = vpow.pop %v1597
        %v1599 = vsel %vm877, %v1598, 0.0
        %1600 = vadd.xlane.f32.xlu0 %v1599
        %v1601 = vpop.xlane.xlu0 %1600
        %v1602 = vrcp.pop %v1601
        %v1603 = vmul.f32 %v1598, %v1602
        %v1604 = vmul.f32 %v1603, %v375
        %v1605 = vsel %vm877, %v1604, 0.0
        %1606 = vadd.xlane.f32.xlu0 %v1605
        %v1607 = vpop.xlane.xlu0 %1606
        %v1608 = vadd.f32 %v1607, 1e-13
        %v1609 = vrcp.pop %v1608
        %v1610 = vmul.f32 %v1604, %v1609
        %v1611 = vrot.slane %v1593, 4
        %v1612 = vmax.f32 %v1593, %v1611
        %v1613 = vrot.slane %v1612, 2
        %v1614 = vmax.f32 %v1612, %v1613
        %v1615 = vrot.slane %v1614, 1
        %v1616 = vmax.f32 %v1614, %v1615
        %v1617 = vsub.f32 %v1592, %v1616
        %v1618 = vmul.f32 %v1617, 1.442695
        %v1619 = vpow.pop %v1618
        %v1620 = vsel %vm877, %v1619, 0.0
        %v1621 = vrot.slane %v1620, 4
        %v1622 = vadd.f32 %v1620, %v1621
        %v1623 = vrot.slane %v1622, 2
        %v1624 = vadd.f32 %v1622, %v1623
        %v1625 = vrot.slane %v1624, 1
        %v1626 = vadd.f32 %v1624, %v1625
        %v1627 = vrcp.pop %v1626
        %v1628 = vmul.f32 %v1619, %v1627
        %v1629 = vmul.f32 %v1628, %v375
        %v1630 = vsel %vm877, %v1629, 0.0
        %v1631 = vrot.slane %v1630, 4
        %v1632 = vadd.f32 %v1630, %v1631
        %v1633 = vrot.slane %v1632, 2
        %v1634 = vadd.f32 %v1632, %v1633
        %v1635 = vrot.slane %v1634, 1
        %v1636 = vadd.f32 %v1634, %v1635
        %v1637 = vadd.f32 %v1636, 1e-13
        %v1638 = vrcp.pop %v1637
        %v1639 = vmul.f32 %v1629, %v1638
        %v1641 = vsel %vm877, %v1610, 0
        %1643 = vmatprep.subr.mxu0 0.0
        %1644 = vmatpush1.msra.mxu0 %v1363
        %1645 = vmatprep.subr.mxu0 0.0
        %1646 = vmatpush1.msra.mxu0 0.0
        %1647 = vmatprep.subr.mxu0 0.0
        %1648 = vmatpush1.msra.mxu0 0.0
        %1649 = vmatprep.subr.mxu0 0.0
        %1650 = vmatpush1.msra.mxu0 0.0
        %1651 = vmatprep.subr.mxu0 0.0
        %1652 = vmatpush1.msra.mxu0 0.0
        %1653 = vmatprep.subr.mxu0 0.0
        %1654 = vmatpush1.msra.mxu0 0.0
        %1655 = vmatprep.subr.mxu0 0.0
        %1656 = vmatpush1.msra.mxu0 0.0
        %1657 = vmatprep.subr.mxu0 0.0
        %1658 = vmatpush1.msra.mxu0 0.0
        %1659 = vmatprep.subr.mxu0 0.0
        %1660 = vmatpush1.msra.mxu0 0.0
        %1661 = vmatprep.subr.mxu0 0.0
        %1662 = vmatpush1.msra.mxu0 0.0
        %1663 = vmatprep.subr.mxu0 0.0
        %1664 = vmatpush1.msra.mxu0 0.0
        %1665 = vmatprep.subr.mxu0 0.0
        %1666 = vmatpush1.msra.mxu0 0.0
        %1667 = vmatprep.subr.mxu0 0.0
        %1668 = vmatpush1.msra.mxu0 0.0
        %1669 = vmatprep.subr.mxu0 0.0
        %1670 = vmatpush1.msra.mxu0 0.0
        %1671 = vmatprep.subr.mxu0 0.0
        %1672 = vmatpush1.msra.mxu0 0.0
        %1673 = vmatprep.subr.mxu0 0.0
        %1674 = vmatpush1.msra.mxu0 0.0
        %1675 = vmatprep.subr.mxu0 0.0
        %1676 = vmatpush1.msra.mxu0 0.0
        %1677 = vmatprep.subr.mxu0 0.0
        %1678 = vmatpush1.msra.mxu0 0.0
        %1679 = vmatprep.subr.mxu0 0.0
        %1680 = vmatpush1.msra.mxu0 0.0
        %1681 = vmatprep.subr.mxu0 0.0
        %1682 = vmatpush1.msra.mxu0 0.0
        %1683 = vmatprep.subr.mxu0 0.0
        %1684 = vmatpush1.msra.mxu0 0.0
        %1685 = vmatprep.subr.mxu0 0.0
        %1686 = vmatpush1.msra.mxu0 0.0
        %1687 = vmatprep.subr.mxu0 0.0
        %1688 = vmatpush1.msra.mxu0 0.0
        %1689 = vmatprep.subr.mxu0 0.0
        %1690 = vmatpush1.msra.mxu0 0.0
        %1691 = vmatprep.subr.mxu0 0.0
        %1692 = vmatpush1.msra.mxu0 0.0
        %1693 = vmatprep.subr.mxu0 0.0
        %1694 = vmatpush1.msra.mxu0 0.0
        %1695 = vmatprep.subr.mxu0 0.0
        %1696 = vmatpush1.msra.mxu0 0.0
        %1697 = vmatprep.subr.mxu0 0.0
        %1698 = vmatpush1.msra.mxu0 0.0
        %1699 = vmatprep.subr.mxu0 0.0
        %1700 = vmatpush1.msra.mxu0 0.0
        %1701 = vmatprep.subr.mxu0 0.0
        %1702 = vmatpush1.msra.mxu0 0.0
        %1703 = vmatprep.subr.mxu0 0.0
        %1704 = vmatpush1.msra.mxu0 0.0
        %1705 = vmatprep.subr.mxu0 0.0
        %1706 = vmatpush1.msra.mxu0 0.0
        %1707 = vmatprep.mubr.f32.mxu0 0.0
        %1708 = vmatmul.mubr.f32.gmra.mrb[0].mxu0 %v1641
        %v1709 = vpop.f32.mrb[0].mxu0
        %v1710 = vadd.f32 0.0, %v1709
        %v1711 = vpop.f32.mrb[0].mxu0
        %1712 = vdwg.mxu0
        %1713 = vxpose.xlu0.b32.start [1/16] %v1639, 128
        %1714 = vxpose.xlu0.b32.cont [2/16] 0.0, 128
        %1715 = vxpose.xlu0.b32.cont [3/16] 0.0, 128
        %1716 = vxpose.xlu0.b32.cont [4/16] 0.0, 128
        %1717 = vxpose.xlu0.b32.cont [5/16] 0.0, 128
        %1718 = vxpose.xlu0.b32.cont [6/16] 0.0, 128
        %1719 = vxpose.xlu0.b32.cont [7/16] 0.0, 128
        %1720 = vxpose.xlu0.b32.cont [8/16] 0.0, 128
        %1721 = vxpose.xlu0.b32.cont [9/16] 0.0, 128
        %1722 = vxpose.xlu0.b32.cont [10/16] 0.0, 128
        %1723 = vxpose.xlu0.b32.cont [11/16] 0.0, 128
        %1724 = vxpose.xlu0.b32.cont [12/16] 0.0, 128
        %1725 = vxpose.xlu0.b32.cont [13/16] 0.0, 128
        %1726 = vxpose.xlu0.b32.cont [14/16] 0.0, 128
        %1727 = vxpose.xlu0.b32.cont [15/16] 0.0, 128
        %1728 = vxpose.xlu0.b32.end [16/16] 0.0, 128
        %v1729 = vpop.trf.xlu0
        %v1730 = vpop.trf.xlu0
        %v1731 = vpop.trf.xlu0
        %v1732 = vpop.trf.xlu0
        %v1733 = vpop.trf.xlu0
        %v1734 = vpop.trf.xlu0
        %v1735 = vpop.trf.xlu0
        %v1736 = vpop.trf.xlu0
        %v1737 = vpop.trf.xlu0
        %v1738 = vpop.trf.xlu0
        %v1739 = vpop.trf.xlu0
        %v1740 = vpop.trf.xlu0
        %v1741 = vpop.trf.xlu0
        %v1742 = vpop.trf.xlu0
        %v1743 = vpop.trf.xlu0
        %v1744 = vpop.trf.xlu0
        %v1746 = vsel %vm877, %v1729, 0
        %1748 = vmatprep.subr.mxu0 0.0
        %1749 = vmatpush1.msra.mxu0 %v1361
        %1750 = vmatprep.subr.mxu0 0.0
        %1751 = vmatpush1.msra.mxu0 0.0
        %1752 = vmatprep.subr.mxu0 0.0
        %1753 = vmatpush1.msra.mxu0 0.0
        %1754 = vmatprep.subr.mxu0 0.0
        %1755 = vmatpush1.msra.mxu0 0.0
        %1756 = vmatprep.subr.mxu0 0.0
        %1757 = vmatpush1.msra.mxu0 0.0
        %1758 = vmatprep.subr.mxu0 0.0
        %1759 = vmatpush1.msra.mxu0 0.0
        %1760 = vmatprep.subr.mxu0 0.0
        %1761 = vmatpush1.msra.mxu0 0.0
        %1762 = vmatprep.subr.mxu0 0.0
        %1763 = vmatpush1.msra.mxu0 0.0
        %1764 = vmatprep.subr.mxu0 0.0
        %1765 = vmatpush1.msra.mxu0 0.0
        %1766 = vmatprep.subr.mxu0 0.0
        %1767 = vmatpush1.msra.mxu0 0.0
        %1768 = vmatprep.subr.mxu0 0.0
        %1769 = vmatpush1.msra.mxu0 0.0
        %1770 = vmatprep.subr.mxu0 0.0
        %1771 = vmatpush1.msra.mxu0 0.0
        %1772 = vmatprep.subr.mxu0 0.0
        %1773 = vmatpush1.msra.mxu0 0.0
        %1774 = vmatprep.subr.mxu0 0.0
        %1775 = vmatpush1.msra.mxu0 0.0
        %1776 = vmatprep.subr.mxu0 0.0
        %1777 = vmatpush1.msra.mxu0 0.0
        %1778 = vmatprep.subr.mxu0 0.0
        %1779 = vmatpush1.msra.mxu0 0.0
        %1780 = vmatprep.subr.mxu0 0.0
        %1781 = vmatpush1.msra.mxu0 0.0
        %1782 = vmatprep.subr.mxu0 0.0
        %1783 = vmatpush1.msra.mxu0 0.0
        %1784 = vmatprep.subr.mxu0 0.0
        %1785 = vmatpush1.msra.mxu0 0.0
        %1786 = vmatprep.subr.mxu0 0.0
        %1787 = vmatpush1.msra.mxu0 0.0
        %1788 = vmatprep.subr.mxu0 0.0
        %1789 = vmatpush1.msra.mxu0 0.0
        %1790 = vmatprep.subr.mxu0 0.0
        %1791 = vmatpush1.msra.mxu0 0.0
        %1792 = vmatprep.subr.mxu0 0.0
        %1793 = vmatpush1.msra.mxu0 0.0
        %1794 = vmatprep.subr.mxu0 0.0
        %1795 = vmatpush1.msra.mxu0 0.0
        %1796 = vmatprep.subr.mxu0 0.0
        %1797 = vmatpush1.msra.mxu0 0.0
        %1798 = vmatprep.subr.mxu0 0.0
        %1799 = vmatpush1.msra.mxu0 0.0
        %1800 = vmatprep.subr.mxu0 0.0
        %1801 = vmatpush1.msra.mxu0 0.0
        %1802 = vmatprep.subr.mxu0 0.0
        %1803 = vmatpush1.msra.mxu0 0.0
        %1804 = vmatprep.subr.mxu0 0.0
        %1805 = vmatpush1.msra.mxu0 0.0
        %1806 = vmatprep.subr.mxu0 0.0
        %1807 = vmatpush1.msra.mxu0 0.0
        %1808 = vmatprep.subr.mxu0 0.0
        %1809 = vmatpush1.msra.mxu0 0.0
        %1810 = vmatprep.subr.mxu0 0.0
        %1811 = vmatpush1.msra.mxu0 0.0
        %1812 = vmatprep.mubr.f32.mxu0 0.0
        %1813 = vmatmul.mubr.f32.gmra.mrb[0].mxu0 %v1746
        %v1814 = vpop.f32.mrb[0].mxu0
        %v1815 = vadd.f32 0.0, %v1814
        %v1816 = vpop.f32.mrb[0].mxu0
        %1817 = vdwg.mxu0
        %v1818 = vadd.f32 %v1441, %v1710
        %v1819 = vadd.f32 %v1442, %v1815
        %s1820 = scalar_lea.vmem %s5, 1
        %v1821 = vld [vmem:[%s1820] sm:$0x1]
        %v1823 = vlaneseq
        %v1824 = vshrl.u32 %v1823, 7
        %v1825 = vsub.s32 0, %v1824
        %v1826 = vrot.slane %v1821, %v1825
        %v1828 = vadd.f32 %v1818, %v1826
        %v1829 = vadd.f32 %v1819, %v1826
        %v1830 = vmax.f32 %v1828, 0.0
        %v1831 = vmax.f32 %v1829, 0.0
        %1832 = vst.msk [vmem:[%s372] sm:$0xff] %vm386, %v1830
        %1833 = vst.msk [vmem:[%s372 + $0x8] sm:$0xff] %vm386, %v1831
        %s1834 = sand.u32 %s176, 1
        %s1835 = scalar_lea.sflag [#allocation4], %s1834
        %s1836 = sand.u32 %s176, 1
        %s1837 = smul.addr %s1836, 16
        %s1838 = scalar_lea.vmem [#allocation11], %s1837
        // Predicated region
        $region65: #{tpu_custom_call.1} parent=43 // pred_check
          %p1839 = pneg %p186
        $region66: #{tpu_custom_call.1} parent=43 // pred_check_branch
          %1841 = sbr.rel (%p1839) target = $region68
        $region67: #{tpu_custom_call.1} parent=43 // pred_region
          %s1843 = ssub.s32 256, 256
          %1844 = vsyncadd %s1835, %s1843
          %s1845 = smul.addr %s27, 2
          %s1846 = smul.addr %s1845, 128
          %s1847 = scalar_lea.hbm %s6, %s1846
          %s1848 = sshll.u32 %s1838, 4
          %s1849 = int_to_ptr.vmem [resolvable:$true] %s1848
          %1854 = dma.vmem_to_hbm [thread:$0]  %s1849, 256, %s1847, %s1835, 128, 128, 8
        $region68: #{tpu_custom_call.1} parent=43 // pred_fallthru
          _
      $region44: #{tpu_custom_call.1} parent=5 // pred_fallthru
        _
      %p1855 = scmp.le.s32.totalorder 2, %s22
      // Predicated region
      $region69: #{tpu_custom_call.1} parent=5 // pred_check
        %p1856 = pneg %p1855
      $region70: #{tpu_custom_call.1} parent=5 // pred_check_branch
        %1858 = sbr.rel (%p1856) target = $region72
      $region71: #{tpu_custom_call.1} parent=5 // pred_region
        %s1859 = ssub.s32 %s22, 2
        // Predicated region
        $region73: #{tpu_custom_call.1} parent=71 // pred_check
          %p1860 = pneg %p192
        $region74: #{tpu_custom_call.1} parent=71 // pred_check_branch
          %1862 = sbr.rel (%p1860) target = $region76
        $region75: #{tpu_custom_call.1} parent=71 // pred_region
          %s1863 = sand.u32 %s177, 1
          %s1864 = scalar_lea.sflag [#allocation4], %s1863
          %s1865 = sand.u32 %s177, 1
          %s1866 = smul.addr %s1865, 16
          %s1867 = scalar_lea.vmem [#allocation11], %s1866
          %1868 = dma.done %s1864, 256
        $region76: #{tpu_custom_call.1} parent=71 // pred_fallthru
          _
      $region72: #{tpu_custom_call.1} parent=5 // pred_fallthru
        _
    $region6: #{tpu_custom_call.1} parent=1 // loop_footer
      %s26 = sadd.s32 1, %s22
    $region7: #{tpu_custom_call.1} parent=1 // loop_footer_branch
      %21 = sbr.rel target = $region3
    $region8: #{tpu_custom_call.1} parent=1 // loop_exit
      _
    %1869 = vsyncpa [#allocation3], 1
    %s1870 = scalar_lea.sflag [#allocation3], 1
    %1871 = vsyncpa %s1870, 1
    %1872 = vsyncpa [#allocation6], 1
    %s1873 = scalar_lea.sflag [#allocation6], 1
    %1874 = vsyncpa %s1873, 1
    %1875 = vsyncpa [#allocation9], 1
    %1876 = vsyncpa [#allocation4], 1
    %s1877 = scalar_lea.sflag [#allocation4], 1
    %1878 = vsyncpa %s1877, 1

</llo_original>
